<compile_context>
chip_gen: v6e
topology: v6e:2x2x1
jax: 0.10.0
libtpu: 0.0.40
codegen_flags: <defaults>
</compile_context>

<pallas_src>
import jax
import jax.numpy as jnp
from jax import lax
from jax.experimental import pallas as pl
from jax.experimental.pallas import tpu as pltpu

LANE = 128


# ----------------------------- Pallas kernel ------------------------------- #
def _make_bilstm_kernel(T, B, Hd):
    def kernel(x_ref, wih_ref, whh_f_ref, whh_b_ref, b_f_ref, b_b_ref,
               fcw_ref, fcb_ref, out_ref):
        # x_ref:    (T*B, E)     time-major embedded input, flattened
        # wih_ref:  (E, 8*Hd)    [fwd | bwd] input->gate weights (gate order i,f,o,g)
        # whh_*:    (Hd, 4*Hd)   hidden->gate weights (gate order i,f,o,g)
        # b_*:      (1, 4*Hd)    b_ih + b_hh (gate order i,f,o,g)
        # fcw_ref:  (2*Hd, Cp)   fc1 weight, lanes padded to a multiple of 128
        # fcb_ref:  (1, Cp)      fc1 bias, lane padded
        # out_ref:  (T*B, Cp)    lane-dense logits slab

        # Hoisted weight/bias loads — tiny, live in vregs for the whole kernel.
        whh_f = whh_f_ref[...]
        whh_b = whh_b_ref[...]
        b_f = b_f_ref[...]
        b_b = b_b_ref[...]

        # One lane-dense input projection for BOTH directions:
        # (T*B, E) @ (E, 8*Hd). Removes 2*T tiny matmuls from the serial chain.
        gx = jnp.dot(x_ref[...], wih_ref[...],
                     preferred_element_type=jnp.float32)

        def cell(pre, h, c, whh, b):
            gates = pre + jnp.dot(h, whh,
                                  preferred_element_type=jnp.float32) + b
            # gate order [i, f, o, g]: one contiguous sigmoid slab, one tanh slab
            sig = jax.nn.sigmoid(gates[:, :3 * Hd])
            g = jnp.tanh(gates[:, 3 * Hd:4 * Hd])
            i = sig[:, 0 * Hd:1 * Hd]
            f = sig[:, 1 * Hd:2 * Hd]
            o = sig[:, 2 * Hd:3 * Hd]
            c_new = f * c + i * g
            h_new = o * jnp.tanh(c_new)
            return h_new, c_new

        hf = jnp.zeros((B, Hd), jnp.float32)
        cf = jnp.zeros((B, Hd), jnp.float32)
        hb = jnp.zeros((B, Hd), jnp.float32)
        cb = jnp.zeros((B, Hd), jnp.float32)
        hf_steps = [None] * T
        hb_steps = [None] * T

        # Fused, fully-unrolled recurrence: iteration s advances the forward
        # direction at time s and the backward direction at time T-1-s, so the
        # two independent h@Whh chains interleave on MXU/EUP.
        for s in range(T):
            tf = s
            tb = T - 1 - s
            pre_f = gx[tf * B:(tf + 1) * B, 0:4 * Hd]
            pre_b = gx[tb * B:(tb + 1) * B, 4 * Hd:8 * Hd]
            hf, cf = cell(pre_f, hf, cf, whh_f, b_f)
            hb, cb = cell(pre_b, hb, cb, whh_b, b_b)
            hf_steps[tf] = hf
            hb_steps[tb] = hb

        # Hidden states never touch VMEM scratch: one FC matmul at the end,
        # written to a lane-dense output slab.
        H = jnp.concatenate(
            [jnp.concatenate(hf_steps, axis=0),
             jnp.concatenate(hb_steps, axis=0)], axis=1)         # (T*B, 2*Hd)
        out_ref[...] = (jnp.dot(H, fcw_ref[...],
                                preferred_element_type=jnp.float32)
                        + fcb_ref[...])
    return kernel


# ------------------------------ wrapper ------------------------------------ #
def _reorder_gates(w):
    """Permute PyTorch gate blocks [i, f, g, o] (stacked on axis 0) -> [i, f, o, g]."""
    Hd = w.shape[0] // 4
    return jnp.concatenate([w[0:2 * Hd], w[3 * Hd:4 * Hd], w[2 * Hd:3 * Hd]],
                           axis=0)


def bilstm_forward(x_ids, mask, params):
    """PyTorch-equivalent forward. mask accepted for API parity (unused,
    exactly like the reference forward)."""
    del mask
    emb = jnp.take(params['embedding'], x_ids, axis=0)           # (B, T, E) glue
    B, T, E = emb.shape
    x2d = jnp.transpose(emb, (1, 0, 2)).reshape(T * B, E).astype(jnp.float32)

    Hd = params['whh_f'].shape[1]                                # (4Hd, Hd)
    C = params['fc_w'].shape[0]
    C_pad = -(-C // LANE) * LANE                                 # lane-dense output

    # Pre-pack weights: gate reorder, transpose, fuse both directions' W_ih.
    wih_f = _reorder_gates(params['wih_f']).T                    # (E, 4Hd)
    wih_b = _reorder_gates(params['wih_b']).T
    wih_all = jnp.concatenate([wih_f, wih_b], axis=1)            # (E, 8Hd)
    whh_f = _reorder_gates(params['whh_f']).T                    # (Hd, 4Hd)
    whh_b = _reorder_gates(params['whh_b']).T
    b_f = _reorder_gates(params['bih_f'] + params['bhh_f'])[None, :]   # (1, 4Hd)
    b_b = _reorder_gates(params['bih_b'] + params['bhh_b'])[None, :]

    fcw = jnp.zeros((2 * Hd, C_pad), jnp.float32).at[:, :C].set(params['fc_w'].T)
    fcb = jnp.zeros((1, C_pad), jnp.float32).at[:, :C].set(params['fc_b'][None, :])

    vmem = pl.BlockSpec(memory_space=pltpu.MemorySpace.VMEM)
    out2d = pl.pallas_call(
        _make_bilstm_kernel(T, B, Hd),
        out_shape=jax.ShapeDtypeStruct((T * B, C_pad), jnp.float32),
        in_specs=[vmem] * 8,
        out_specs=vmem,
    )(x2d, wih_all, whh_f, whh_b, b_f, b_b, fcw, fcb)

    out = out2d[:, :C].reshape(T, B, C)
    return jnp.transpose(out, (1, 0, 2))                         # (B, T, C)


# --------------------------- pure-JAX reference ----------------------------- #
def _lstm_dir_ref(x_tbe, wih, whh, b_ih, b_hh, reverse):
    T, B, _ = x_tbe.shape
    Hd = whh.shape[1]

    def step(carry, xt):
        h, c = carry
        gates = xt @ wih.T + h @ whh.T + b_ih + b_hh
        i, f, g, o = jnp.split(gates, 4, axis=-1)
        i, f, o = jax.nn.sigmoid(i), jax.nn.sigmoid(f), jax.nn.sigmoid(o)
        g = jnp.tanh(g)
        c = f * c + i * g
        h = o * jnp.tanh(c)
        return (h, c), h

    xs = x_tbe[::-1] if reverse else x_tbe
    _, hs = lax.scan(step, (jnp.zeros((B, Hd)), jnp.zeros((B, Hd))), xs)
    return hs[::-1] if reverse else hs


def bilstm_reference(x_ids, params):
    emb = jnp.take(params['embedding'], x_ids, axis=0)
    x_tbe = jnp.transpose(emb, (1, 0, 2)).astype(jnp.float32)
    hf = _lstm_dir_ref(x_tbe, params['wih_f'], params['whh_f'],
                       params['bih_f'], params['bhh_f'], reverse=False)
    hb = _lstm_dir_ref(x_tbe, params['wih_b'], params['whh_b'],
                       params['bih_b'], params['bhh_b'], reverse=True)
    h = jnp.concatenate([hf, hb], axis=-1)                       # (T, B, 2Hd)
    out = h @ params['fc_w'].T + params['fc_b']                  # (T, B, C)
    return jnp.transpose(out, (1, 0, 2))


# ------------------------------- main --------------------------------------- #
if __name__ == "__main__":
    vocab_size, embed_size, hidden_size, n_classes = 50, 32, 32, 4
    B, T = 2, 8
    Hd = hidden_size // 2

    key = jax.random.PRNGKey(0)
    ks = jax.random.split(key, 12)
    params = {
        'embedding': jax.random.normal(ks[0], (vocab_size, embed_size), jnp.float32) * 0.1,
        'wih_f': jax.random.normal(ks[1], (4 * Hd, embed_size), jnp.float32) * 0.1,
        'whh_f': jax.random.normal(ks[2], (4 * Hd, Hd), jnp.float32) * 0.1,
        'bih_f': jax.random.normal(ks[3], (4 * Hd,), jnp.float32) * 0.1,
        'bhh_f': jax.random.normal(ks[4], (4 * Hd,), jnp.float32) * 0.1,
        'wih_b': jax.random.normal(ks[5], (4 * Hd, embed_size), jnp.float32) * 0.1,
        'whh_b': jax.random.normal(ks[6], (4 * Hd, Hd), jnp.float32) * 0.1,
        'bih_b': jax.random.normal(ks[7], (4 * Hd,), jnp.float32) * 0.1,
        'bhh_b': jax.random.normal(ks[8], (4 * Hd,), jnp.float32) * 0.1,
        'fc_w': jax.random.normal(ks[9], (n_classes, hidden_size), jnp.float32) * 0.1,
        'fc_b': jax.random.normal(ks[10], (n_classes,), jnp.float32) * 0.1,
    }

    x_ids = jax.random.randint(ks[11], (B, T), 0, vocab_size, dtype=jnp.int32)
    mask = jnp.ones((B, T), jnp.float32)   # unused by forward (as in PyTorch)

    out = jax.block_until_ready(bilstm_forward(x_ids, mask, params))
    ref = jax.block_until_ready(bilstm_reference(x_ids, params))

    assert out.shape == (B, T, n_classes), out.shape
    assert jnp.allclose(out, ref, atol=1e-4, rtol=1e-4), \
        float(jnp.max(jnp.abs(out - ref)))
    print("KERNEL_OK")
</pallas_src>

<mosaic_0001>
module attributes {stable_mosaic.version = 11 : i64} {
  func.func @kernel(%arg0: memref<16x32xf32, #tpu.memory_space<vmem>>, %arg1: memref<32x128xf32, #tpu.memory_space<vmem>>, %arg2: memref<16x64xf32, #tpu.memory_space<vmem>>, %arg3: memref<16x64xf32, #tpu.memory_space<vmem>>, %arg4: memref<1x64xf32, #tpu.memory_space<vmem>>, %arg5: memref<1x64xf32, #tpu.memory_space<vmem>>, %arg6: memref<32x128xf32, #tpu.memory_space<vmem>>, %arg7: memref<1x128xf32, #tpu.memory_space<vmem>>, %arg8: memref<16x128xf32, #tpu.memory_space<vmem>>) attributes {dimension_semantics = [], scalar_prefetch = 0 : i64, scratch_operands = 0 : i64, tpu.core_type = #tpu.core_type<tc>} {
    %c0 = arith.constant 0 : index
    %c0_0 = arith.constant 0 : index
    %0 = vector.load %arg2[%c0, %c0_0] : memref<16x64xf32, #tpu.memory_space<vmem>>, vector<16x64xf32>
    %c0_1 = arith.constant 0 : index
    %c0_2 = arith.constant 0 : index
    %1 = vector.load %arg3[%c0_1, %c0_2] : memref<16x64xf32, #tpu.memory_space<vmem>>, vector<16x64xf32>
    %c0_3 = arith.constant 0 : index
    %c0_4 = arith.constant 0 : index
    %2 = vector.load %arg4[%c0_3, %c0_4] : memref<1x64xf32, #tpu.memory_space<vmem>>, vector<1x64xf32>
    %c0_5 = arith.constant 0 : index
    %c0_6 = arith.constant 0 : index
    %3 = vector.load %arg5[%c0_5, %c0_6] : memref<1x64xf32, #tpu.memory_space<vmem>>, vector<1x64xf32>
    %c0_7 = arith.constant 0 : index
    %c0_8 = arith.constant 0 : index
    %4 = vector.load %arg0[%c0_7, %c0_8] : memref<16x32xf32, #tpu.memory_space<vmem>>, vector<16x32xf32>
    %c0_9 = arith.constant 0 : index
    %c0_10 = arith.constant 0 : index
    %5 = vector.load %arg1[%c0_9, %c0_10] : memref<32x128xf32, #tpu.memory_space<vmem>>, vector<32x128xf32>
    %cst = arith.constant dense<0.000000e+00> : vector<16x128xf32>
    %6 = tpu.matmul %4, %5, %cst {dimension_numbers = #tpu.dot_dimension_numbers<[1], [0], [0], [1], [0, 0, 1, 1], [], []>} : vector<16x32xf32>, vector<32x128xf32>, vector<16x128xf32> -> vector<16x128xf32>
    %cst_11 = arith.constant 0.000000e+00 : f32
    %7 = vector.broadcast %cst_11 : f32 to vector<2x16xf32>
    %cst_12 = arith.constant 0.000000e+00 : f32
    %8 = vector.broadcast %cst_12 : f32 to vector<2x16xf32>
    %cst_13 = arith.constant 0.000000e+00 : f32
    %9 = vector.broadcast %cst_13 : f32 to vector<2x16xf32>
    %cst_14 = arith.constant 0.000000e+00 : f32
    %10 = vector.broadcast %cst_14 : f32 to vector<2x16xf32>
    %11 = vector.extract_strided_slice %6 {offsets = [0, 0], sizes = [2, 64], strides = [1, 1]} : vector<16x128xf32> to vector<2x64xf32>
    %12 = vector.extract_strided_slice %6 {offsets = [14, 64], sizes = [2, 64], strides = [1, 1]} : vector<16x128xf32> to vector<2x64xf32>
    %cst_15 = arith.constant dense<0.000000e+00> : vector<2x64xf32>
    %13 = tpu.matmul %7, %0, %cst_15 {dimension_numbers = #tpu.dot_dimension_numbers<[1], [0], [0], [1], [0, 0, 1, 1], [], []>} : vector<2x16xf32>, vector<16x64xf32>, vector<2x64xf32> -> vector<2x64xf32>
    %14 = arith.addf %11, %13 : vector<2x64xf32>
    %15 = vector.broadcast %2 : vector<1x64xf32> to vector<2x64xf32>
    %16 = arith.addf %14, %15 : vector<2x64xf32>
    %17 = vector.extract_strided_slice %16 {offsets = [0, 0], sizes = [2, 48], strides = [1, 1]} : vector<2x64xf32> to vector<2x48xf32>
    %18 = arith.negf %17 : vector<2x48xf32>
    %19 = math.exp %18 : vector<2x48xf32>
    %cst_16 = arith.constant 1.000000e+00 : f32
    %20 = vector.broadcast %cst_16 : f32 to vector<2x48xf32>
    %21 = arith.addf %20, %19 : vector<2x48xf32>
    %22 = arith.divf %20, %21 : vector<2x48xf32>
    %23 = vector.extract_strided_slice %16 {offsets = [0, 48], sizes = [2, 16], strides = [1, 1]} : vector<2x64xf32> to vector<2x16xf32>
    %24 = math.tanh %23 : vector<2x16xf32>
    %25 = vector.extract_strided_slice %22 {offsets = [0, 0], sizes = [2, 16], strides = [1, 1]} : vector<2x48xf32> to vector<2x16xf32>
    %26 = vector.extract_strided_slice %22 {offsets = [0, 16], sizes = [2, 16], strides = [1, 1]} : vector<2x48xf32> to vector<2x16xf32>
    %27 = vector.extract_strided_slice %22 {offsets = [0, 32], sizes = [2, 16], strides = [1, 1]} : vector<2x48xf32> to vector<2x16xf32>
    %28 = arith.mulf %26, %8 : vector<2x16xf32>
    %29 = arith.mulf %25, %24 : vector<2x16xf32>
    %30 = arith.addf %28, %29 : vector<2x16xf32>
    %31 = math.tanh %30 : vector<2x16xf32>
    %32 = arith.mulf %27, %31 : vector<2x16xf32>
    %cst_17 = arith.constant dense<0.000000e+00> : vector<2x64xf32>
    %33 = tpu.matmul %9, %1, %cst_17 {dimension_numbers = #tpu.dot_dimension_numbers<[1], [0], [0], [1], [0, 0, 1, 1], [], []>} : vector<2x16xf32>, vector<16x64xf32>, vector<2x64xf32> -> vector<2x64xf32>
    %34 = arith.addf %12, %33 : vector<2x64xf32>
    %35 = vector.broadcast %3 : vector<1x64xf32> to vector<2x64xf32>
    %36 = arith.addf %34, %35 : vector<2x64xf32>
    %37 = vector.extract_strided_slice %36 {offsets = [0, 0], sizes = [2, 48], strides = [1, 1]} : vector<2x64xf32> to vector<2x48xf32>
    %38 = arith.negf %37 : vector<2x48xf32>
    %39 = math.exp %38 : vector<2x48xf32>
    %cst_18 = arith.constant 1.000000e+00 : f32
    %40 = vector.broadcast %cst_18 : f32 to vector<2x48xf32>
    %41 = arith.addf %40, %39 : vector<2x48xf32>
    %42 = arith.divf %40, %41 : vector<2x48xf32>
    %43 = vector.extract_strided_slice %36 {offsets = [0, 48], sizes = [2, 16], strides = [1, 1]} : vector<2x64xf32> to vector<2x16xf32>
    %44 = math.tanh %43 : vector<2x16xf32>
    %45 = vector.extract_strided_slice %42 {offsets = [0, 0], sizes = [2, 16], strides = [1, 1]} : vector<2x48xf32> to vector<2x16xf32>
    %46 = vector.extract_strided_slice %42 {offsets = [0, 16], sizes = [2, 16], strides = [1, 1]} : vector<2x48xf32> to vector<2x16xf32>
    %47 = vector.extract_strided_slice %42 {offsets = [0, 32], sizes = [2, 16], strides = [1, 1]} : vector<2x48xf32> to vector<2x16xf32>
    %48 = arith.mulf %46, %10 : vector<2x16xf32>
    %49 = arith.mulf %45, %44 : vector<2x16xf32>
    %50 = arith.addf %48, %49 : vector<2x16xf32>
    %51 = math.tanh %50 : vector<2x16xf32>
    %52 = arith.mulf %47, %51 : vector<2x16xf32>
    %53 = vector.extract_strided_slice %6 {offsets = [2, 0], sizes = [2, 64], strides = [1, 1]} : vector<16x128xf32> to vector<2x64xf32>
    %54 = vector.extract_strided_slice %6 {offsets = [12, 64], sizes = [2, 64], strides = [1, 1]} : vector<16x128xf32> to vector<2x64xf32>
    %cst_19 = arith.constant dense<0.000000e+00> : vector<2x64xf32>
    %55 = tpu.matmul %32, %0, %cst_19 {dimension_numbers = #tpu.dot_dimension_numbers<[1], [0], [0], [1], [0, 0, 1, 1], [], []>} : vector<2x16xf32>, vector<16x64xf32>, vector<2x64xf32> -> vector<2x64xf32>
    %56 = arith.addf %53, %55 : vector<2x64xf32>
    %57 = vector.broadcast %2 : vector<1x64xf32> to vector<2x64xf32>
    %58 = arith.addf %56, %57 : vector<2x64xf32>
    %59 = vector.extract_strided_slice %58 {offsets = [0, 0], sizes = [2, 48], strides = [1, 1]} : vector<2x64xf32> to vector<2x48xf32>
    %60 = arith.negf %59 : vector<2x48xf32>
    %61 = math.exp %60 : vector<2x48xf32>
    %cst_20 = arith.constant 1.000000e+00 : f32
    %62 = vector.broadcast %cst_20 : f32 to vector<2x48xf32>
    %63 = arith.addf %62, %61 : vector<2x48xf32>
    %64 = arith.divf %62, %63 : vector<2x48xf32>
    %65 = vector.extract_strided_slice %58 {offsets = [0, 48], sizes = [2, 16], strides = [1, 1]} : vector<2x64xf32> to vector<2x16xf32>
    %66 = math.tanh %65 : vector<2x16xf32>
    %67 = vector.extract_strided_slice %64 {offsets = [0, 0], sizes = [2, 16], strides = [1, 1]} : vector<2x48xf32> to vector<2x16xf32>
    %68 = vector.extract_strided_slice %64 {offsets = [0, 16], sizes = [2, 16], strides = [1, 1]} : vector<2x48xf32> to vector<2x16xf32>
    %69 = vector.extract_strided_slice %64 {offsets = [0, 32], sizes = [2, 16], strides = [1, 1]} : vector<2x48xf32> to vector<2x16xf32>
    %70 = arith.mulf %68, %30 : vector<2x16xf32>
    %71 = arith.mulf %67, %66 : vector<2x16xf32>
    %72 = arith.addf %70, %71 : vector<2x16xf32>
    %73 = math.tanh %72 : vector<2x16xf32>
    %74 = arith.mulf %69, %73 : vector<2x16xf32>
    %cst_21 = arith.constant dense<0.000000e+00> : vector<2x64xf32>
    %75 = tpu.matmul %52, %1, %cst_21 {dimension_numbers = #tpu.dot_dimension_numbers<[1], [0], [0], [1], [0, 0, 1, 1], [], []>} : vector<2x16xf32>, vector<16x64xf32>, vector<2x64xf32> -> vector<2x64xf32>
    %76 = arith.addf %54, %75 : vector<2x64xf32>
    %77 = vector.broadcast %3 : vector<1x64xf32> to vector<2x64xf32>
    %78 = arith.addf %76, %77 : vector<2x64xf32>
    %79 = vector.extract_strided_slice %78 {offsets = [0, 0], sizes = [2, 48], strides = [1, 1]} : vector<2x64xf32> to vector<2x48xf32>
    %80 = arith.negf %79 : vector<2x48xf32>
    %81 = math.exp %80 : vector<2x48xf32>
    %cst_22 = arith.constant 1.000000e+00 : f32
    %82 = vector.broadcast %cst_22 : f32 to vector<2x48xf32>
    %83 = arith.addf %82, %81 : vector<2x48xf32>
    %84 = arith.divf %82, %83 : vector<2x48xf32>
    %85 = vector.extract_strided_slice %78 {offsets = [0, 48], sizes = [2, 16], strides = [1, 1]} : vector<2x64xf32> to vector<2x16xf32>
    %86 = math.tanh %85 : vector<2x16xf32>
    %87 = vector.extract_strided_slice %84 {offsets = [0, 0], sizes = [2, 16], strides = [1, 1]} : vector<2x48xf32> to vector<2x16xf32>
    %88 = vector.extract_strided_slice %84 {offsets = [0, 16], sizes = [2, 16], strides = [1, 1]} : vector<2x48xf32> to vector<2x16xf32>
    %89 = vector.extract_strided_slice %84 {offsets = [0, 32], sizes = [2, 16], strides = [1, 1]} : vector<2x48xf32> to vector<2x16xf32>
    %90 = arith.mulf %88, %50 : vector<2x16xf32>
    %91 = arith.mulf %87, %86 : vector<2x16xf32>
    %92 = arith.addf %90, %91 : vector<2x16xf32>
    %93 = math.tanh %92 : vector<2x16xf32>
    %94 = arith.mulf %89, %93 : vector<2x16xf32>
    %95 = vector.extract_strided_slice %6 {offsets = [4, 0], sizes = [2, 64], strides = [1, 1]} : vector<16x128xf32> to vector<2x64xf32>
    %96 = vector.extract_strided_slice %6 {offsets = [10, 64], sizes = [2, 64], strides = [1, 1]} : vector<16x128xf32> to vector<2x64xf32>
    %cst_23 = arith.constant dense<0.000000e+00> : vector<2x64xf32>
    %97 = tpu.matmul %74, %0, %cst_23 {dimension_numbers = #tpu.dot_dimension_numbers<[1], [0], [0], [1], [0, 0, 1, 1], [], []>} : vector<2x16xf32>, vector<16x64xf32>, vector<2x64xf32> -> vector<2x64xf32>
    %98 = arith.addf %95, %97 : vector<2x64xf32>
    %99 = vector.broadcast %2 : vector<1x64xf32> to vector<2x64xf32>
    %100 = arith.addf %98, %99 : vector<2x64xf32>
    %101 = vector.extract_strided_slice %100 {offsets = [0, 0], sizes = [2, 48], strides = [1, 1]} : vector<2x64xf32> to vector<2x48xf32>
    %102 = arith.negf %101 : vector<2x48xf32>
    %103 = math.exp %102 : vector<2x48xf32>
    %cst_24 = arith.constant 1.000000e+00 : f32
    %104 = vector.broadcast %cst_24 : f32 to vector<2x48xf32>
    %105 = arith.addf %104, %103 : vector<2x48xf32>
    %106 = arith.divf %104, %105 : vector<2x48xf32>
    %107 = vector.extract_strided_slice %100 {offsets = [0, 48], sizes = [2, 16], strides = [1, 1]} : vector<2x64xf32> to vector<2x16xf32>
    %108 = math.tanh %107 : vector<2x16xf32>
    %109 = vector.extract_strided_slice %106 {offsets = [0, 0], sizes = [2, 16], strides = [1, 1]} : vector<2x48xf32> to vector<2x16xf32>
    %110 = vector.extract_strided_slice %106 {offsets = [0, 16], sizes = [2, 16], strides = [1, 1]} : vector<2x48xf32> to vector<2x16xf32>
    %111 = vector.extract_strided_slice %106 {offsets = [0, 32], sizes = [2, 16], strides = [1, 1]} : vector<2x48xf32> to vector<2x16xf32>
    %112 = arith.mulf %110, %72 : vector<2x16xf32>
    %113 = arith.mulf %109, %108 : vector<2x16xf32>
    %114 = arith.addf %112, %113 : vector<2x16xf32>
    %115 = math.tanh %114 : vector<2x16xf32>
    %116 = arith.mulf %111, %115 : vector<2x16xf32>
    %cst_25 = arith.constant dense<0.000000e+00> : vector<2x64xf32>
    %117 = tpu.matmul %94, %1, %cst_25 {dimension_numbers = #tpu.dot_dimension_numbers<[1], [0], [0], [1], [0, 0, 1, 1], [], []>} : vector<2x16xf32>, vector<16x64xf32>, vector<2x64xf32> -> vector<2x64xf32>
    %118 = arith.addf %96, %117 : vector<2x64xf32>
    %119 = vector.broadcast %3 : vector<1x64xf32> to vector<2x64xf32>
    %120 = arith.addf %118, %119 : vector<2x64xf32>
    %121 = vector.extract_strided_slice %120 {offsets = [0, 0], sizes = [2, 48], strides = [1, 1]} : vector<2x64xf32> to vector<2x48xf32>
    %122 = arith.negf %121 : vector<2x48xf32>
    %123 = math.exp %122 : vector<2x48xf32>
    %cst_26 = arith.constant 1.000000e+00 : f32
    %124 = vector.broadcast %cst_26 : f32 to vector<2x48xf32>
    %125 = arith.addf %124, %123 : vector<2x48xf32>
    %126 = arith.divf %124, %125 : vector<2x48xf32>
    %127 = vector.extract_strided_slice %120 {offsets = [0, 48], sizes = [2, 16], strides = [1, 1]} : vector<2x64xf32> to vector<2x16xf32>
    %128 = math.tanh %127 : vector<2x16xf32>
    %129 = vector.extract_strided_slice %126 {offsets = [0, 0], sizes = [2, 16], strides = [1, 1]} : vector<2x48xf32> to vector<2x16xf32>
    %130 = vector.extract_strided_slice %126 {offsets = [0, 16], sizes = [2, 16], strides = [1, 1]} : vector<2x48xf32> to vector<2x16xf32>
    %131 = vector.extract_strided_slice %126 {offsets = [0, 32], sizes = [2, 16], strides = [1, 1]} : vector<2x48xf32> to vector<2x16xf32>
    %132 = arith.mulf %130, %92 : vector<2x16xf32>
    %133 = arith.mulf %129, %128 : vector<2x16xf32>
    %134 = arith.addf %132, %133 : vector<2x16xf32>
    %135 = math.tanh %134 : vector<2x16xf32>
    %136 = arith.mulf %131, %135 : vector<2x16xf32>
    %137 = vector.extract_strided_slice %6 {offsets = [6, 0], sizes = [2, 64], strides = [1, 1]} : vector<16x128xf32> to vector<2x64xf32>
    %138 = vector.extract_strided_slice %6 {offsets = [8, 64], sizes = [2, 64], strides = [1, 1]} : vector<16x128xf32> to vector<2x64xf32>
    %cst_27 = arith.constant dense<0.000000e+00> : vector<2x64xf32>
    %139 = tpu.matmul %116, %0, %cst_27 {dimension_numbers = #tpu.dot_dimension_numbers<[1], [0], [0], [1], [0, 0, 1, 1], [], []>} : vector<2x16xf32>, vector<16x64xf32>, vector<2x64xf32> -> vector<2x64xf32>
    %140 = arith.addf %137, %139 : vector<2x64xf32>
    %141 = vector.broadcast %2 : vector<1x64xf32> to vector<2x64xf32>
    %142 = arith.addf %140, %141 : vector<2x64xf32>
    %143 = vector.extract_strided_slice %142 {offsets = [0, 0], sizes = [2, 48], strides = [1, 1]} : vector<2x64xf32> to vector<2x48xf32>
    %144 = arith.negf %143 : vector<2x48xf32>
    %145 = math.exp %144 : vector<2x48xf32>
    %cst_28 = arith.constant 1.000000e+00 : f32
    %146 = vector.broadcast %cst_28 : f32 to vector<2x48xf32>
    %147 = arith.addf %146, %145 : vector<2x48xf32>
    %148 = arith.divf %146, %147 : vector<2x48xf32>
    %149 = vector.extract_strided_slice %142 {offsets = [0, 48], sizes = [2, 16], strides = [1, 1]} : vector<2x64xf32> to vector<2x16xf32>
    %150 = math.tanh %149 : vector<2x16xf32>
    %151 = vector.extract_strided_slice %148 {offsets = [0, 0], sizes = [2, 16], strides = [1, 1]} : vector<2x48xf32> to vector<2x16xf32>
    %152 = vector.extract_strided_slice %148 {offsets = [0, 16], sizes = [2, 16], strides = [1, 1]} : vector<2x48xf32> to vector<2x16xf32>
    %153 = vector.extract_strided_slice %148 {offsets = [0, 32], sizes = [2, 16], strides = [1, 1]} : vector<2x48xf32> to vector<2x16xf32>
    %154 = arith.mulf %152, %114 : vector<2x16xf32>
    %155 = arith.mulf %151, %150 : vector<2x16xf32>
    %156 = arith.addf %154, %155 : vector<2x16xf32>
    %157 = math.tanh %156 : vector<2x16xf32>
    %158 = arith.mulf %153, %157 : vector<2x16xf32>
    %cst_29 = arith.constant dense<0.000000e+00> : vector<2x64xf32>
    %159 = tpu.matmul %136, %1, %cst_29 {dimension_numbers = #tpu.dot_dimension_numbers<[1], [0], [0], [1], [0, 0, 1, 1], [], []>} : vector<2x16xf32>, vector<16x64xf32>, vector<2x64xf32> -> vector<2x64xf32>
    %160 = arith.addf %138, %159 : vector<2x64xf32>
    %161 = vector.broadcast %3 : vector<1x64xf32> to vector<2x64xf32>
    %162 = arith.addf %160, %161 : vector<2x64xf32>
    %163 = vector.extract_strided_slice %162 {offsets = [0, 0], sizes = [2, 48], strides = [1, 1]} : vector<2x64xf32> to vector<2x48xf32>
    %164 = arith.negf %163 : vector<2x48xf32>
    %165 = math.exp %164 : vector<2x48xf32>
    %cst_30 = arith.constant 1.000000e+00 : f32
    %166 = vector.broadcast %cst_30 : f32 to vector<2x48xf32>
    %167 = arith.addf %166, %165 : vector<2x48xf32>
    %168 = arith.divf %166, %167 : vector<2x48xf32>
    %169 = vector.extract_strided_slice %162 {offsets = [0, 48], sizes = [2, 16], strides = [1, 1]} : vector<2x64xf32> to vector<2x16xf32>
    %170 = math.tanh %169 : vector<2x16xf32>
    %171 = vector.extract_strided_slice %168 {offsets = [0, 0], sizes = [2, 16], strides = [1, 1]} : vector<2x48xf32> to vector<2x16xf32>
    %172 = vector.extract_strided_slice %168 {offsets = [0, 16], sizes = [2, 16], strides = [1, 1]} : vector<2x48xf32> to vector<2x16xf32>
    %173 = vector.extract_strided_slice %168 {offsets = [0, 32], sizes = [2, 16], strides = [1, 1]} : vector<2x48xf32> to vector<2x16xf32>
    %174 = arith.mulf %172, %134 : vector<2x16xf32>
    %175 = arith.mulf %171, %170 : vector<2x16xf32>
    %176 = arith.addf %174, %175 : vector<2x16xf32>
    %177 = math.tanh %176 : vector<2x16xf32>
    %178 = arith.mulf %173, %177 : vector<2x16xf32>
    %179 = vector.extract_strided_slice %6 {offsets = [8, 0], sizes = [2, 64], strides = [1, 1]} : vector<16x128xf32> to vector<2x64xf32>
    %180 = vector.extract_strided_slice %6 {offsets = [6, 64], sizes = [2, 64], strides = [1, 1]} : vector<16x128xf32> to vector<2x64xf32>
    %cst_31 = arith.constant dense<0.000000e+00> : vector<2x64xf32>
    %181 = tpu.matmul %158, %0, %cst_31 {dimension_numbers = #tpu.dot_dimension_numbers<[1], [0], [0], [1], [0, 0, 1, 1], [], []>} : vector<2x16xf32>, vector<16x64xf32>, vector<2x64xf32> -> vector<2x64xf32>
    %182 = arith.addf %179, %181 : vector<2x64xf32>
    %183 = vector.broadcast %2 : vector<1x64xf32> to vector<2x64xf32>
    %184 = arith.addf %182, %183 : vector<2x64xf32>
    %185 = vector.extract_strided_slice %184 {offsets = [0, 0], sizes = [2, 48], strides = [1, 1]} : vector<2x64xf32> to vector<2x48xf32>
    %186 = arith.negf %185 : vector<2x48xf32>
    %187 = math.exp %186 : vector<2x48xf32>
    %cst_32 = arith.constant 1.000000e+00 : f32
    %188 = vector.broadcast %cst_32 : f32 to vector<2x48xf32>
    %189 = arith.addf %188, %187 : vector<2x48xf32>
    %190 = arith.divf %188, %189 : vector<2x48xf32>
    %191 = vector.extract_strided_slice %184 {offsets = [0, 48], sizes = [2, 16], strides = [1, 1]} : vector<2x64xf32> to vector<2x16xf32>
    %192 = math.tanh %191 : vector<2x16xf32>
    %193 = vector.extract_strided_slice %190 {offsets = [0, 0], sizes = [2, 16], strides = [1, 1]} : vector<2x48xf32> to vector<2x16xf32>
    %194 = vector.extract_strided_slice %190 {offsets = [0, 16], sizes = [2, 16], strides = [1, 1]} : vector<2x48xf32> to vector<2x16xf32>
    %195 = vector.extract_strided_slice %190 {offsets = [0, 32], sizes = [2, 16], strides = [1, 1]} : vector<2x48xf32> to vector<2x16xf32>
    %196 = arith.mulf %194, %156 : vector<2x16xf32>
    %197 = arith.mulf %193, %192 : vector<2x16xf32>
    %198 = arith.addf %196, %197 : vector<2x16xf32>
    %199 = math.tanh %198 : vector<2x16xf32>
    %200 = arith.mulf %195, %199 : vector<2x16xf32>
    %cst_33 = arith.constant dense<0.000000e+00> : vector<2x64xf32>
    %201 = tpu.matmul %178, %1, %cst_33 {dimension_numbers = #tpu.dot_dimension_numbers<[1], [0], [0], [1], [0, 0, 1, 1], [], []>} : vector<2x16xf32>, vector<16x64xf32>, vector<2x64xf32> -> vector<2x64xf32>
    %202 = arith.addf %180, %201 : vector<2x64xf32>
    %203 = vector.broadcast %3 : vector<1x64xf32> to vector<2x64xf32>
    %204 = arith.addf %202, %203 : vector<2x64xf32>
    %205 = vector.extract_strided_slice %204 {offsets = [0, 0], sizes = [2, 48], strides = [1, 1]} : vector<2x64xf32> to vector<2x48xf32>
    %206 = arith.negf %205 : vector<2x48xf32>
    %207 = math.exp %206 : vector<2x48xf32>
    %cst_34 = arith.constant 1.000000e+00 : f32
    %208 = vector.broadcast %cst_34 : f32 to vector<2x48xf32>
    %209 = arith.addf %208, %207 : vector<2x48xf32>
    %210 = arith.divf %208, %209 : vector<2x48xf32>
    %211 = vector.extract_strided_slice %204 {offsets = [0, 48], sizes = [2, 16], strides = [1, 1]} : vector<2x64xf32> to vector<2x16xf32>
    %212 = math.tanh %211 : vector<2x16xf32>
    %213 = vector.extract_strided_slice %210 {offsets = [0, 0], sizes = [2, 16], strides = [1, 1]} : vector<2x48xf32> to vector<2x16xf32>
    %214 = vector.extract_strided_slice %210 {offsets = [0, 16], sizes = [2, 16], strides = [1, 1]} : vector<2x48xf32> to vector<2x16xf32>
    %215 = vector.extract_strided_slice %210 {offsets = [0, 32], sizes = [2, 16], strides = [1, 1]} : vector<2x48xf32> to vector<2x16xf32>
    %216 = arith.mulf %214, %176 : vector<2x16xf32>
    %217 = arith.mulf %213, %212 : vector<2x16xf32>
    %218 = arith.addf %216, %217 : vector<2x16xf32>
    %219 = math.tanh %218 : vector<2x16xf32>
    %220 = arith.mulf %215, %219 : vector<2x16xf32>
    %221 = vector.extract_strided_slice %6 {offsets = [10, 0], sizes = [2, 64], strides = [1, 1]} : vector<16x128xf32> to vector<2x64xf32>
    %222 = vector.extract_strided_slice %6 {offsets = [4, 64], sizes = [2, 64], strides = [1, 1]} : vector<16x128xf32> to vector<2x64xf32>
    %cst_35 = arith.constant dense<0.000000e+00> : vector<2x64xf32>
    %223 = tpu.matmul %200, %0, %cst_35 {dimension_numbers = #tpu.dot_dimension_numbers<[1], [0], [0], [1], [0, 0, 1, 1], [], []>} : vector<2x16xf32>, vector<16x64xf32>, vector<2x64xf32> -> vector<2x64xf32>
    %224 = arith.addf %221, %223 : vector<2x64xf32>
    %225 = vector.broadcast %2 : vector<1x64xf32> to vector<2x64xf32>
    %226 = arith.addf %224, %225 : vector<2x64xf32>
    %227 = vector.extract_strided_slice %226 {offsets = [0, 0], sizes = [2, 48], strides = [1, 1]} : vector<2x64xf32> to vector<2x48xf32>
    %228 = arith.negf %227 : vector<2x48xf32>
    %229 = math.exp %228 : vector<2x48xf32>
    %cst_36 = arith.constant 1.000000e+00 : f32
    %230 = vector.broadcast %cst_36 : f32 to vector<2x48xf32>
    %231 = arith.addf %230, %229 : vector<2x48xf32>
    %232 = arith.divf %230, %231 : vector<2x48xf32>
    %233 = vector.extract_strided_slice %226 {offsets = [0, 48], sizes = [2, 16], strides = [1, 1]} : vector<2x64xf32> to vector<2x16xf32>
    %234 = math.tanh %233 : vector<2x16xf32>
    %235 = vector.extract_strided_slice %232 {offsets = [0, 0], sizes = [2, 16], strides = [1, 1]} : vector<2x48xf32> to vector<2x16xf32>
    %236 = vector.extract_strided_slice %232 {offsets = [0, 16], sizes = [2, 16], strides = [1, 1]} : vector<2x48xf32> to vector<2x16xf32>
    %237 = vector.extract_strided_slice %232 {offsets = [0, 32], sizes = [2, 16], strides = [1, 1]} : vector<2x48xf32> to vector<2x16xf32>
    %238 = arith.mulf %236, %198 : vector<2x16xf32>
    %239 = arith.mulf %235, %234 : vector<2x16xf32>
    %240 = arith.addf %238, %239 : vector<2x16xf32>
    %241 = math.tanh %240 : vector<2x16xf32>
    %242 = arith.mulf %237, %241 : vector<2x16xf32>
    %cst_37 = arith.constant dense<0.000000e+00> : vector<2x64xf32>
    %243 = tpu.matmul %220, %1, %cst_37 {dimension_numbers = #tpu.dot_dimension_numbers<[1], [0], [0], [1], [0, 0, 1, 1], [], []>} : vector<2x16xf32>, vector<16x64xf32>, vector<2x64xf32> -> vector<2x64xf32>
    %244 = arith.addf %222, %243 : vector<2x64xf32>
    %245 = vector.broadcast %3 : vector<1x64xf32> to vector<2x64xf32>
    %246 = arith.addf %244, %245 : vector<2x64xf32>
    %247 = vector.extract_strided_slice %246 {offsets = [0, 0], sizes = [2, 48], strides = [1, 1]} : vector<2x64xf32> to vector<2x48xf32>
    %248 = arith.negf %247 : vector<2x48xf32>
    %249 = math.exp %248 : vector<2x48xf32>
    %cst_38 = arith.constant 1.000000e+00 : f32
    %250 = vector.broadcast %cst_38 : f32 to vector<2x48xf32>
    %251 = arith.addf %250, %249 : vector<2x48xf32>
    %252 = arith.divf %250, %251 : vector<2x48xf32>
    %253 = vector.extract_strided_slice %246 {offsets = [0, 48], sizes = [2, 16], strides = [1, 1]} : vector<2x64xf32> to vector<2x16xf32>
    %254 = math.tanh %253 : vector<2x16xf32>
    %255 = vector.extract_strided_slice %252 {offsets = [0, 0], sizes = [2, 16], strides = [1, 1]} : vector<2x48xf32> to vector<2x16xf32>
    %256 = vector.extract_strided_slice %252 {offsets = [0, 16], sizes = [2, 16], strides = [1, 1]} : vector<2x48xf32> to vector<2x16xf32>
    %257 = vector.extract_strided_slice %252 {offsets = [0, 32], sizes = [2, 16], strides = [1, 1]} : vector<2x48xf32> to vector<2x16xf32>
    %258 = arith.mulf %256, %218 : vector<2x16xf32>
    %259 = arith.mulf %255, %254 : vector<2x16xf32>
    %260 = arith.addf %258, %259 : vector<2x16xf32>
    %261 = math.tanh %260 : vector<2x16xf32>
    %262 = arith.mulf %257, %261 : vector<2x16xf32>
    %263 = vector.extract_strided_slice %6 {offsets = [12, 0], sizes = [2, 64], strides = [1, 1]} : vector<16x128xf32> to vector<2x64xf32>
    %264 = vector.extract_strided_slice %6 {offsets = [2, 64], sizes = [2, 64], strides = [1, 1]} : vector<16x128xf32> to vector<2x64xf32>
    %cst_39 = arith.constant dense<0.000000e+00> : vector<2x64xf32>
    %265 = tpu.matmul %242, %0, %cst_39 {dimension_numbers = #tpu.dot_dimension_numbers<[1], [0], [0], [1], [0, 0, 1, 1], [], []>} : vector<2x16xf32>, vector<16x64xf32>, vector<2x64xf32> -> vector<2x64xf32>
    %266 = arith.addf %263, %265 : vector<2x64xf32>
    %267 = vector.broadcast %2 : vector<1x64xf32> to vector<2x64xf32>
    %268 = arith.addf %266, %267 : vector<2x64xf32>
    %269 = vector.extract_strided_slice %268 {offsets = [0, 0], sizes = [2, 48], strides = [1, 1]} : vector<2x64xf32> to vector<2x48xf32>
    %270 = arith.negf %269 : vector<2x48xf32>
    %271 = math.exp %270 : vector<2x48xf32>
    %cst_40 = arith.constant 1.000000e+00 : f32
    %272 = vector.broadcast %cst_40 : f32 to vector<2x48xf32>
    %273 = arith.addf %272, %271 : vector<2x48xf32>
    %274 = arith.divf %272, %273 : vector<2x48xf32>
    %275 = vector.extract_strided_slice %268 {offsets = [0, 48], sizes = [2, 16], strides = [1, 1]} : vector<2x64xf32> to vector<2x16xf32>
    %276 = math.tanh %275 : vector<2x16xf32>
    %277 = vector.extract_strided_slice %274 {offsets = [0, 0], sizes = [2, 16], strides = [1, 1]} : vector<2x48xf32> to vector<2x16xf32>
    %278 = vector.extract_strided_slice %274 {offsets = [0, 16], sizes = [2, 16], strides = [1, 1]} : vector<2x48xf32> to vector<2x16xf32>
    %279 = vector.extract_strided_slice %274 {offsets = [0, 32], sizes = [2, 16], strides = [1, 1]} : vector<2x48xf32> to vector<2x16xf32>
    %280 = arith.mulf %278, %240 : vector<2x16xf32>
    %281 = arith.mulf %277, %276 : vector<2x16xf32>
    %282 = arith.addf %280, %281 : vector<2x16xf32>
    %283 = math.tanh %282 : vector<2x16xf32>
    %284 = arith.mulf %279, %283 : vector<2x16xf32>
    %cst_41 = arith.constant dense<0.000000e+00> : vector<2x64xf32>
    %285 = tpu.matmul %262, %1, %cst_41 {dimension_numbers = #tpu.dot_dimension_numbers<[1], [0], [0], [1], [0, 0, 1, 1], [], []>} : vector<2x16xf32>, vector<16x64xf32>, vector<2x64xf32> -> vector<2x64xf32>
    %286 = arith.addf %264, %285 : vector<2x64xf32>
    %287 = vector.broadcast %3 : vector<1x64xf32> to vector<2x64xf32>
    %288 = arith.addf %286, %287 : vector<2x64xf32>
    %289 = vector.extract_strided_slice %288 {offsets = [0, 0], sizes = [2, 48], strides = [1, 1]} : vector<2x64xf32> to vector<2x48xf32>
    %290 = arith.negf %289 : vector<2x48xf32>
    %291 = math.exp %290 : vector<2x48xf32>
    %cst_42 = arith.constant 1.000000e+00 : f32
    %292 = vector.broadcast %cst_42 : f32 to vector<2x48xf32>
    %293 = arith.addf %292, %291 : vector<2x48xf32>
    %294 = arith.divf %292, %293 : vector<2x48xf32>
    %295 = vector.extract_strided_slice %288 {offsets = [0, 48], sizes = [2, 16], strides = [1, 1]} : vector<2x64xf32> to vector<2x16xf32>
    %296 = math.tanh %295 : vector<2x16xf32>
    %297 = vector.extract_strided_slice %294 {offsets = [0, 0], sizes = [2, 16], strides = [1, 1]} : vector<2x48xf32> to vector<2x16xf32>
    %298 = vector.extract_strided_slice %294 {offsets = [0, 16], sizes = [2, 16], strides = [1, 1]} : vector<2x48xf32> to vector<2x16xf32>
    %299 = vector.extract_strided_slice %294 {offsets = [0, 32], sizes = [2, 16], strides = [1, 1]} : vector<2x48xf32> to vector<2x16xf32>
    %300 = arith.mulf %298, %260 : vector<2x16xf32>
    %301 = arith.mulf %297, %296 : vector<2x16xf32>
    %302 = arith.addf %300, %301 : vector<2x16xf32>
    %303 = math.tanh %302 : vector<2x16xf32>
    %304 = arith.mulf %299, %303 : vector<2x16xf32>
    %305 = vector.extract_strided_slice %6 {offsets = [14, 0], sizes = [2, 64], strides = [1, 1]} : vector<16x128xf32> to vector<2x64xf32>
    %306 = vector.extract_strided_slice %6 {offsets = [0, 64], sizes = [2, 64], strides = [1, 1]} : vector<16x128xf32> to vector<2x64xf32>
    %cst_43 = arith.constant dense<0.000000e+00> : vector<2x64xf32>
    %307 = tpu.matmul %284, %0, %cst_43 {dimension_numbers = #tpu.dot_dimension_numbers<[1], [0], [0], [1], [0, 0, 1, 1], [], []>} : vector<2x16xf32>, vector<16x64xf32>, vector<2x64xf32> -> vector<2x64xf32>
    %308 = arith.addf %305, %307 : vector<2x64xf32>
    %309 = vector.broadcast %2 : vector<1x64xf32> to vector<2x64xf32>
    %310 = arith.addf %308, %309 : vector<2x64xf32>
    %311 = vector.extract_strided_slice %310 {offsets = [0, 0], sizes = [2, 48], strides = [1, 1]} : vector<2x64xf32> to vector<2x48xf32>
    %312 = arith.negf %311 : vector<2x48xf32>
    %313 = math.exp %312 : vector<2x48xf32>
    %cst_44 = arith.constant 1.000000e+00 : f32
    %314 = vector.broadcast %cst_44 : f32 to vector<2x48xf32>
    %315 = arith.addf %314, %313 : vector<2x48xf32>
    %316 = arith.divf %314, %315 : vector<2x48xf32>
    %317 = vector.extract_strided_slice %310 {offsets = [0, 48], sizes = [2, 16], strides = [1, 1]} : vector<2x64xf32> to vector<2x16xf32>
    %318 = math.tanh %317 : vector<2x16xf32>
    %319 = vector.extract_strided_slice %316 {offsets = [0, 0], sizes = [2, 16], strides = [1, 1]} : vector<2x48xf32> to vector<2x16xf32>
    %320 = vector.extract_strided_slice %316 {offsets = [0, 16], sizes = [2, 16], strides = [1, 1]} : vector<2x48xf32> to vector<2x16xf32>
    %321 = vector.extract_strided_slice %316 {offsets = [0, 32], sizes = [2, 16], strides = [1, 1]} : vector<2x48xf32> to vector<2x16xf32>
    %322 = arith.mulf %320, %282 : vector<2x16xf32>
    %323 = arith.mulf %319, %318 : vector<2x16xf32>
    %324 = arith.addf %322, %323 : vector<2x16xf32>
    %325 = math.tanh %324 : vector<2x16xf32>
    %326 = arith.mulf %321, %325 : vector<2x16xf32>
    %cst_45 = arith.constant dense<0.000000e+00> : vector<2x64xf32>
    %327 = tpu.matmul %304, %1, %cst_45 {dimension_numbers = #tpu.dot_dimension_numbers<[1], [0], [0], [1], [0, 0, 1, 1], [], []>} : vector<2x16xf32>, vector<16x64xf32>, vector<2x64xf32> -> vector<2x64xf32>
    %328 = arith.addf %306, %327 : vector<2x64xf32>
    %329 = vector.broadcast %3 : vector<1x64xf32> to vector<2x64xf32>
    %330 = arith.addf %328, %329 : vector<2x64xf32>
    %331 = vector.extract_strided_slice %330 {offsets = [0, 0], sizes = [2, 48], strides = [1, 1]} : vector<2x64xf32> to vector<2x48xf32>
    %332 = arith.negf %331 : vector<2x48xf32>
    %333 = math.exp %332 : vector<2x48xf32>
    %cst_46 = arith.constant 1.000000e+00 : f32
    %334 = vector.broadcast %cst_46 : f32 to vector<2x48xf32>
    %335 = arith.addf %334, %333 : vector<2x48xf32>
    %336 = arith.divf %334, %335 : vector<2x48xf32>
    %337 = vector.extract_strided_slice %330 {offsets = [0, 48], sizes = [2, 16], strides = [1, 1]} : vector<2x64xf32> to vector<2x16xf32>
    %338 = math.tanh %337 : vector<2x16xf32>
    %339 = vector.extract_strided_slice %336 {offsets = [0, 0], sizes = [2, 16], strides = [1, 1]} : vector<2x48xf32> to vector<2x16xf32>
    %340 = vector.extract_strided_slice %336 {offsets = [0, 16], sizes = [2, 16], strides = [1, 1]} : vector<2x48xf32> to vector<2x16xf32>
    %341 = vector.extract_strided_slice %336 {offsets = [0, 32], sizes = [2, 16], strides = [1, 1]} : vector<2x48xf32> to vector<2x16xf32>
    %342 = arith.mulf %340, %302 : vector<2x16xf32>
    %343 = arith.mulf %339, %338 : vector<2x16xf32>
    %344 = arith.addf %342, %343 : vector<2x16xf32>
    %345 = math.tanh %344 : vector<2x16xf32>
    %346 = arith.mulf %341, %345 : vector<2x16xf32>
    %347 = tpu.concatenate %32, %74, %116, %158, %200, %242, %284, %326 in 0 : vector<2x16xf32>, vector<2x16xf32>, vector<2x16xf32>, vector<2x16xf32>, vector<2x16xf32>, vector<2x16xf32>, vector<2x16xf32>, vector<2x16xf32> -> vector<16x16xf32>
    %348 = tpu.concatenate %346, %304, %262, %220, %178, %136, %94, %52 in 0 : vector<2x16xf32>, vector<2x16xf32>, vector<2x16xf32>, vector<2x16xf32>, vector<2x16xf32>, vector<2x16xf32>, vector<2x16xf32>, vector<2x16xf32> -> vector<16x16xf32>
    %349 = tpu.concatenate %347, %348 in 1 : vector<16x16xf32>, vector<16x16xf32> -> vector<16x32xf32>
    %c0_47 = arith.constant 0 : index
    %c0_48 = arith.constant 0 : index
    %350 = vector.load %arg6[%c0_47, %c0_48] : memref<32x128xf32, #tpu.memory_space<vmem>>, vector<32x128xf32>
    %cst_49 = arith.constant dense<0.000000e+00> : vector<16x128xf32>
    %351 = tpu.matmul %349, %350, %cst_49 {dimension_numbers = #tpu.dot_dimension_numbers<[1], [0], [0], [1], [0, 0, 1, 1], [], []>} : vector<16x32xf32>, vector<32x128xf32>, vector<16x128xf32> -> vector<16x128xf32>
    %c0_50 = arith.constant 0 : index
    %c0_51 = arith.constant 0 : index
    %352 = vector.load %arg7[%c0_50, %c0_51] : memref<1x128xf32, #tpu.memory_space<vmem>>, vector<1x128xf32>
    %353 = vector.broadcast %352 : vector<1x128xf32> to vector<16x128xf32>
    %354 = arith.addf %351, %353 : vector<16x128xf32>
    %c0_52 = arith.constant 0 : index
    %c0_53 = arith.constant 0 : index
    %355 = vector.load %arg8[%c0_52, %c0_53] : memref<16x128xf32, #tpu.memory_space<vmem>>, vector<16x128xf32>
    tpu.vector_store %arg8[%c0_52, %c0_53], %354 {strides = array<i32>} : memref<16x128xf32, #tpu.memory_space<vmem>>, vector<16x128xf32>,
    return
  }
}

</mosaic_0001>

<llo_original>
// kernel: tpu_custom_call.1
$region0: #{tpu_custom_call.1}
  #allocation0 [shape = 'u32[]', space=smem, size = 0x4, offset = 0x4, fixed_abs, tag = 'smem constant byte address 0x4 - core index']
  #allocation1 [shape = 'u32[144,128]{1,0:T(1,128)}', space=vmem, size = 0x12000, scoped, tag = 'internal scratch']
  %s0 = inlined_call_operand.hbm [shape: f32[16,32], index: 0, kind: input, shape index: {}]
  %s1 = inlined_call_operand.hbm [shape: f32[32,128], index: 1, kind: input, shape index: {}]
  %s2 = inlined_call_operand.hbm [shape: f32[16,64], index: 2, kind: input, shape index: {}]
  %s3 = inlined_call_operand.hbm [shape: f32[16,64], index: 3, kind: input, shape index: {}]
  %s4 = inlined_call_operand.vmem [shape: f32[1,64], index: 4, kind: input, shape index: {}]
  %s5 = inlined_call_operand.vmem [shape: f32[1,64], index: 5, kind: input, shape index: {}]
  %s6 = inlined_call_operand.hbm [shape: f32[32,128], index: 6, kind: input, shape index: {}]
  %s7 = inlined_call_operand.vmem [shape: f32[1,128], index: 7, kind: input, shape index: {}]
  %s8 = inlined_call_operand.hbm [shape: f32[16,128], index: 8, kind: output, shape index: {}]
  %s9 = sld [smem:[#allocation0]]
  $region62: #{tpu_custom_call.1} parent=0
    _
  %s11 = ssub.s32 1, %s9
  %s12 = scalar_select 0, %s11, %s9
  $region1: #{tpu_custom_call.1} parent=0
    #allocation2 [shape = 'u8[8192]{0}', space=vmem, size = 0x2000, scoped, tag = 'input window, operand 0, single buffered']
    #allocation3 [shape = 's32[1]{0}', space=sflag, size = 0x4, scoped, tag = 'scoped memory for tpu_custom_call.1']
    #allocation4 [shape = 's32[1]{0}', space=sflag, size = 0x4, scoped, tag = 'scoped memory for tpu_custom_call.1']
    #allocation5 [shape = 'u8[16384]{0}', space=vmem, size = 0x4000, scoped, tag = 'input window, operand 1, single buffered']
    #allocation6 [shape = 's32[1]{0}', space=sflag, size = 0x4, scoped, tag = 'scoped memory for tpu_custom_call.1']
    #allocation7 [shape = 'u8[8192]{0}', space=vmem, size = 0x2000, scoped, tag = 'input window, operand 2, single buffered']
    #allocation8 [shape = 'u8[8192]{0}', space=vmem, size = 0x2000, scoped, tag = 'input window, operand 3, single buffered']
    #allocation9 [shape = 's32[1]{0}', space=sflag, size = 0x4, scoped, tag = 'scoped memory for tpu_custom_call.1']
    #allocation10 [shape = 'u8[16384]{0}', space=vmem, size = 0x4000, scoped, tag = 'input window, operand 6, single buffered']
    #allocation11 [shape = 'u8[8192]{0}', space=vmem, size = 0x2000, scoped, tag = 'output window, operand 0, single buffered']
    %13 = vsyncpa [#allocation3], 0
    %14 = vsyncpa [#allocation6], 0
    %15 = vsyncpa [#allocation9], 0
    %16 = vsyncpa [#allocation4], 0
    // Predicated region
    $region2: #{tpu_custom_call.1} parent=1 // pred_check
      _
    $region3: #{tpu_custom_call.1} parent=1 // pred_check_branch
      %18 = sbr.rel (0) target = $region5
    $region4: #{tpu_custom_call.1} parent=1 // pred_region
      %s20 = ssub.s32 256, 256
      %21 = vsyncadd [#allocation3], %s20
      %s22 = sshll.u32 [#allocation2], 4
      %s23 = int_to_ptr.vmem [resolvable:$true] %s22
      %28 = dma.hbm_to_vmem [thread:$0]  %s0, 256, %s23, [#allocation3], 128, 128, 8
    $region5: #{tpu_custom_call.1} parent=1 // pred_fallthru
      _
    // Predicated region
    $region6: #{tpu_custom_call.1} parent=1 // pred_check
      _
    $region7: #{tpu_custom_call.1} parent=1 // pred_check_branch
      %30 = sbr.rel (0) target = $region9
    $region8: #{tpu_custom_call.1} parent=1 // pred_region
      %s32 = ssub.s32 512, 512
      %33 = vsyncadd [#allocation6], %s32
      %s34 = sshll.u32 [#allocation5], 4
      %s35 = int_to_ptr.vmem [resolvable:$true] %s34
      %40 = dma.hbm_to_vmem [thread:$0]  %s1, 512, %s35, [#allocation6], 128, 128, 8
    $region9: #{tpu_custom_call.1} parent=1 // pred_fallthru
      _
    // Predicated region
    $region10: #{tpu_custom_call.1} parent=1 // pred_check
      _
    $region11: #{tpu_custom_call.1} parent=1 // pred_check_branch
      %42 = sbr.rel (0) target = $region13
    $region12: #{tpu_custom_call.1} parent=1 // pred_region
      %s44 = ssub.s32 256, 256
      %45 = vsyncadd [#allocation6], %s44
      %s46 = sshll.u32 [#allocation7], 4
      %s47 = int_to_ptr.vmem [resolvable:$true] %s46
      %52 = dma.hbm_to_vmem [thread:$0]  %s2, 256, %s47, [#allocation6], 128, 128, 8
    $region13: #{tpu_custom_call.1} parent=1 // pred_fallthru
      _
    // Predicated region
    $region14: #{tpu_custom_call.1} parent=1 // pred_check
      _
    $region15: #{tpu_custom_call.1} parent=1 // pred_check_branch
      %54 = sbr.rel (0) target = $region17
    $region16: #{tpu_custom_call.1} parent=1 // pred_region
      %s56 = ssub.s32 256, 256
      %57 = vsyncadd [#allocation9], %s56
      %s58 = sshll.u32 [#allocation8], 4
      %s59 = int_to_ptr.vmem [resolvable:$true] %s58
      %64 = dma.hbm_to_vmem [thread:$0]  %s3, 256, %s59, [#allocation9], 128, 128, 8
    $region17: #{tpu_custom_call.1} parent=1 // pred_fallthru
      _
    // Predicated region
    $region18: #{tpu_custom_call.1} parent=1 // pred_check
      _
    $region19: #{tpu_custom_call.1} parent=1 // pred_check_branch
      %66 = sbr.rel (0) target = $region21
    $region20: #{tpu_custom_call.1} parent=1 // pred_region
      _
    $region21: #{tpu_custom_call.1} parent=1 // pred_fallthru
      _
    // Predicated region
    $region22: #{tpu_custom_call.1} parent=1 // pred_check
      _
    $region23: #{tpu_custom_call.1} parent=1 // pred_check_branch
      %68 = sbr.rel (0) target = $region25
    $region24: #{tpu_custom_call.1} parent=1 // pred_region
      _
    $region25: #{tpu_custom_call.1} parent=1 // pred_fallthru
      _
    // Predicated region
    $region26: #{tpu_custom_call.1} parent=1 // pred_check
      _
    $region27: #{tpu_custom_call.1} parent=1 // pred_check_branch
      %70 = sbr.rel (0) target = $region29
    $region28: #{tpu_custom_call.1} parent=1 // pred_region
      %s72 = ssub.s32 512, 512
      %73 = vsyncadd [#allocation9], %s72
      %s74 = sshll.u32 [#allocation10], 4
      %s75 = int_to_ptr.vmem [resolvable:$true] %s74
      %80 = dma.hbm_to_vmem [thread:$0]  %s6, 512, %s75, [#allocation9], 128, 128, 8
    $region29: #{tpu_custom_call.1} parent=1 // pred_fallthru
      _
    // Predicated region
    $region30: #{tpu_custom_call.1} parent=1 // pred_check
      _
    $region31: #{tpu_custom_call.1} parent=1 // pred_check_branch
      %82 = sbr.rel (0) target = $region33
    $region32: #{tpu_custom_call.1} parent=1 // pred_region
      _
    $region33: #{tpu_custom_call.1} parent=1 // pred_fallthru
      _
    // Predicated region
    $region34: #{tpu_custom_call.1} parent=1 // pred_check
      _
    $region35: #{tpu_custom_call.1} parent=1 // pred_check_branch
      %84 = sbr.rel (0) target = $region37
    $region36: #{tpu_custom_call.1} parent=1 // pred_region
      %85 = dma.done [#allocation3], 256
    $region37: #{tpu_custom_call.1} parent=1 // pred_fallthru
      _
    // Predicated region
    $region38: #{tpu_custom_call.1} parent=1 // pred_check
      _
    $region39: #{tpu_custom_call.1} parent=1 // pred_check_branch
      %87 = sbr.rel (0) target = $region41
    $region40: #{tpu_custom_call.1} parent=1 // pred_region
      %88 = dma.done [#allocation6], 512
    $region41: #{tpu_custom_call.1} parent=1 // pred_fallthru
      _
    // Predicated region
    $region42: #{tpu_custom_call.1} parent=1 // pred_check
      _
    $region43: #{tpu_custom_call.1} parent=1 // pred_check_branch
      %90 = sbr.rel (0) target = $region45
    $region44: #{tpu_custom_call.1} parent=1 // pred_region
      %91 = dma.done [#allocation6], 256
    $region45: #{tpu_custom_call.1} parent=1 // pred_fallthru
      _
    // Predicated region
    $region46: #{tpu_custom_call.1} parent=1 // pred_check
      _
    $region47: #{tpu_custom_call.1} parent=1 // pred_check_branch
      %93 = sbr.rel (0) target = $region49
    $region48: #{tpu_custom_call.1} parent=1 // pred_region
      %94 = dma.done [#allocation9], 256
    $region49: #{tpu_custom_call.1} parent=1 // pred_fallthru
      _
    // Predicated region
    $region50: #{tpu_custom_call.1} parent=1 // pred_check
      _
    $region51: #{tpu_custom_call.1} parent=1 // pred_check_branch
      %96 = sbr.rel (0) target = $region53
    $region52: #{tpu_custom_call.1} parent=1 // pred_region
      %97 = dma.done [#allocation9], 512
    $region53: #{tpu_custom_call.1} parent=1 // pred_fallthru
      _
    %v98 = vld [vmem:[#allocation7] sm:$0xff]
    %v99 = vld [vmem:[#allocation7 + $0x8] sm:$0xff]
    %v100 = vld [vmem:[#allocation8] sm:$0xff]
    %v101 = vld [vmem:[#allocation8 + $0x8] sm:$0xff]
    %v102 = vld [vmem:[%s4] sm:$0x1]
    %v103 = vld [vmem:[%s5] sm:$0x1]
    %v104 = vld [vmem:[#allocation2] sm:$0xff]
    %v105 = vld [vmem:[#allocation2 + $0x8] sm:$0xff]
    %v106 = vld [vmem:[#allocation5] sm:$0xff]
    %v107 = vld [vmem:[#allocation5 + $0x8] sm:$0xff]
    %v108 = vld [vmem:[#allocation5 + $0x10] sm:$0xff]
    %v109 = vld [vmem:[#allocation5 + $0x18] sm:$0xff]
    %vm110 = vcmask 261120
    %v112 = vsel %vm110, %v104, 0
    %v115 = vsel %vm110, %v105, 0
    %117 = vmatprep.subr.mxu0 0.0
    %118 = vmatpush1.msra.mxu0 0.0
    %119 = vmatprep.subr.mxu0 0.0
    %120 = vmatpush1.msra.mxu0 0.0
    %121 = vmatprep.subr.mxu0 0.0
    %122 = vmatpush1.msra.mxu0 0.0
    %123 = vmatprep.subr.mxu0 0.0
    %124 = vmatpush1.msra.mxu0 0.0
    %125 = vmatprep.subr.mxu0 0.0
    %126 = vmatpush1.msra.mxu0 0.0
    %127 = vmatprep.subr.mxu0 0.0
    %128 = vmatpush1.msra.mxu0 0.0
    %129 = vmatprep.subr.mxu0 0.0
    %130 = vmatpush1.msra.mxu0 0.0
    %131 = vmatprep.subr.mxu0 0.0
    %132 = vmatpush1.msra.mxu0 0.0
    %133 = vmatprep.subr.mxu0 0.0
    %134 = vmatpush1.msra.mxu0 0.0
    %135 = vmatprep.subr.mxu0 0.0
    %136 = vmatpush1.msra.mxu0 0.0
    %137 = vmatprep.subr.mxu0 0.0
    %138 = vmatpush1.msra.mxu0 0.0
    %139 = vmatprep.subr.mxu0 0.0
    %140 = vmatpush1.msra.mxu0 0.0
    %141 = vmatprep.subr.mxu0 0.0
    %142 = vmatpush1.msra.mxu0 %v109
    %143 = vmatprep.subr.mxu0 0.0
    %144 = vmatpush1.msra.mxu0 %v108
    %145 = vmatprep.subr.mxu0 0.0
    %146 = vmatpush1.msra.mxu0 %v107
    %147 = vmatprep.subr.mxu0 0.0
    %148 = vmatpush1.msra.mxu0 %v106
    %149 = vmatprep.subr.mxu0 0.0
    %150 = vmatpush2.msra.mxu0 0.0
    %151 = vmatprep.subr.mxu0 0.0
    %152 = vmatpush2.msra.mxu0 0.0
    %153 = vmatprep.subr.mxu0 0.0
    %154 = vmatpush2.msra.mxu0 0.0
    %155 = vmatprep.subr.mxu0 0.0
    %156 = vmatpush2.msra.mxu0 0.0
    %157 = vmatprep.subr.mxu0 0.0
    %158 = vmatpush2.msra.mxu0 0.0
    %159 = vmatprep.subr.mxu0 0.0
    %160 = vmatpush2.msra.mxu0 0.0
    %161 = vmatprep.subr.mxu0 0.0
    %162 = vmatpush2.msra.mxu0 0.0
    %163 = vmatprep.subr.mxu0 0.0
    %164 = vmatpush2.msra.mxu0 0.0
    %165 = vmatprep.subr.mxu0 0.0
    %166 = vmatpush2.msra.mxu0 0.0
    %167 = vmatprep.subr.mxu0 0.0
    %168 = vmatpush2.msra.mxu0 0.0
    %169 = vmatprep.subr.mxu0 0.0
    %170 = vmatpush2.msra.mxu0 0.0
    %171 = vmatprep.subr.mxu0 0.0
    %172 = vmatpush2.msra.mxu0 0.0
    %173 = vmatprep.subr.mxu0 0.0
    %174 = vmatpush2.msra.mxu0 0.0
    %175 = vmatprep.subr.mxu0 0.0
    %176 = vmatpush2.msra.mxu0 0.0
    %177 = vmatprep.subr.mxu0 0.0
    %178 = vmatpush2.msra.mxu0 0.0
    %179 = vmatprep.subr.mxu0 0.0
    %180 = vmatpush2.msra.mxu0 0.0
    %181 = vmatprep.mubr.f32.mxu0 0.0
    %182 = vmatmul.mubr.f32.gmra.mxu0 %v112
    %v183 = vpop.f32.mrf.mxu0
    %v184 = vadd.f32 0.0, %v183
    %v185 = vpop.f32.mrf.mxu0
    %186 = vmatprep.mubr.f32.mxu0 0.0
    %187 = vmatmul.mubr.f32.gmra.mxu0 %v115
    %v188 = vpop.f32.mrf.mxu0
    %v189 = vadd.f32 0.0, %v188
    %v190 = vpop.f32.mrf.mxu0
    %191 = vdwg.mxu0
    %vm192 = vcmask 130048
    %v194 = vsel %vm192, 0.0, 0
    %196 = vmatprep.subr.mxu0 0.0
    %197 = vmatpush1.msra.mxu0 0.0
    %198 = vmatprep.subr.mxu0 0.0
    %199 = vmatpush1.msra.mxu0 0.0
    %200 = vmatprep.subr.mxu0 0.0
    %201 = vmatpush1.msra.mxu0 0.0
    %202 = vmatprep.subr.mxu0 0.0
    %203 = vmatpush1.msra.mxu0 0.0
    %204 = vmatprep.subr.mxu0 0.0
    %205 = vmatpush1.msra.mxu0 0.0
    %206 = vmatprep.subr.mxu0 0.0
    %207 = vmatpush1.msra.mxu0 0.0
    %208 = vmatprep.subr.mxu0 0.0
    %209 = vmatpush1.msra.mxu0 0.0
    %210 = vmatprep.subr.mxu0 0.0
    %211 = vmatpush1.msra.mxu0 0.0
    %212 = vmatprep.subr.mxu0 0.0
    %213 = vmatpush1.msra.mxu0 0.0
    %214 = vmatprep.subr.mxu0 0.0
    %215 = vmatpush1.msra.mxu0 0.0
    %216 = vmatprep.subr.mxu0 0.0
    %217 = vmatpush1.msra.mxu0 0.0
    %218 = vmatprep.subr.mxu0 0.0
    %219 = vmatpush1.msra.mxu0 0.0
    %220 = vmatprep.subr.mxu0 0.0
    %221 = vmatpush1.msra.mxu0 0.0
    %222 = vmatprep.subr.mxu0 0.0
    %223 = vmatpush1.msra.mxu0 0.0
    %224 = vmatprep.subr.mxu0 0.0
    %225 = vmatpush1.msra.mxu0 %v99
    %226 = vmatprep.subr.mxu0 0.0
    %227 = vmatpush1.msra.mxu0 %v98
    %228 = vmatprep.subr.mxu0 0.0
    %229 = vmatpush2.msra.mxu0 0.0
    %230 = vmatprep.subr.mxu0 0.0
    %231 = vmatpush2.msra.mxu0 0.0
    %232 = vmatprep.subr.mxu0 0.0
    %233 = vmatpush2.msra.mxu0 0.0
    %234 = vmatprep.subr.mxu0 0.0
    %235 = vmatpush2.msra.mxu0 0.0
    %236 = vmatprep.subr.mxu0 0.0
    %237 = vmatpush2.msra.mxu0 0.0
    %238 = vmatprep.subr.mxu0 0.0
    %239 = vmatpush2.msra.mxu0 0.0
    %240 = vmatprep.subr.mxu0 0.0
    %241 = vmatpush2.msra.mxu0 0.0
    %242 = vmatprep.subr.mxu0 0.0
    %243 = vmatpush2.msra.mxu0 0.0
    %244 = vmatprep.subr.mxu0 0.0
    %245 = vmatpush2.msra.mxu0 0.0
    %246 = vmatprep.subr.mxu0 0.0
    %247 = vmatpush2.msra.mxu0 0.0
    %248 = vmatprep.subr.mxu0 0.0
    %249 = vmatpush2.msra.mxu0 0.0
    %250 = vmatprep.subr.mxu0 0.0
    %251 = vmatpush2.msra.mxu0 0.0
    %252 = vmatprep.subr.mxu0 0.0
    %253 = vmatpush2.msra.mxu0 0.0
    %254 = vmatprep.subr.mxu0 0.0
    %255 = vmatpush2.msra.mxu0 0.0
    %256 = vmatprep.subr.mxu0 0.0
    %257 = vmatpush2.msra.mxu0 0.0
    %258 = vmatprep.subr.mxu0 0.0
    %259 = vmatpush2.msra.mxu0 0.0
    %260 = vmatprep.mubr.f32.mxu0 0.0
    %261 = vmatmul.mubr.f32.gmra.mxu0 %v194
    %v262 = vpop.f32.mrf.mxu0
    %v263 = vadd.f32 0.0, %v262
    %v264 = vpop.f32.mrf.mxu0
    %265 = vdwg.mxu0
    %v266 = vadd.f32 %v184, %v263
    %v268 = vlaneseq
    %v269 = vshrl.u32 %v268, 7
    %v270 = vsub.s32 0, %v269
    %v271 = vrot.slane %v102, %v270
    %v273 = vadd.f32 %v266, %v271
    %v274 = vxor.u32 %v273, 2147483648
    %v275 = vmul.f32 %v274, 1.442695
    %v276 = vpow.pop %v275
    %v277 = vadd.f32 %v276, 1.0
    %v278 = vrcp.pop %v277
    %v279 = vmul.f32 1.0, %v278
    %v280 = vtanh.pop %v273
    %v281 = vmul.f32 %v279, 0.0
    %283 = vrot.lane.b32.xlu0 %v280, 80
    %v284 = vpop.permute.xlu0 %283
    %v286 = vmul.f32 %v279, %v284
    %288 = vrot.lane.b32.xlu0 %v286, 16
    %v289 = vpop.permute.xlu0 %288
    %v291 = vadd.f32 %v281, %v289
    %v292 = vtanh.pop %v291
    %294 = vrot.lane.b32.xlu0 %v292, 16
    %v295 = vpop.permute.xlu0 %294
    %v297 = vmul.f32 %v279, %v295
    %298 = vmatprep.subr.mxu0 0.0
    %299 = vmatpush1.msra.mxu0 0.0
    %300 = vmatprep.subr.mxu0 0.0
    %301 = vmatpush1.msra.mxu0 0.0
    %302 = vmatprep.subr.mxu0 0.0
    %303 = vmatpush1.msra.mxu0 0.0
    %304 = vmatprep.subr.mxu0 0.0
    %305 = vmatpush1.msra.mxu0 0.0
    %306 = vmatprep.subr.mxu0 0.0
    %307 = vmatpush1.msra.mxu0 0.0
    %308 = vmatprep.subr.mxu0 0.0
    %309 = vmatpush1.msra.mxu0 0.0
    %310 = vmatprep.subr.mxu0 0.0
    %311 = vmatpush1.msra.mxu0 0.0
    %312 = vmatprep.subr.mxu0 0.0
    %313 = vmatpush1.msra.mxu0 0.0
    %314 = vmatprep.subr.mxu0 0.0
    %315 = vmatpush1.msra.mxu0 0.0
    %316 = vmatprep.subr.mxu0 0.0
    %317 = vmatpush1.msra.mxu0 0.0
    %318 = vmatprep.subr.mxu0 0.0
    %319 = vmatpush1.msra.mxu0 0.0
    %320 = vmatprep.subr.mxu0 0.0
    %321 = vmatpush1.msra.mxu0 0.0
    %322 = vmatprep.subr.mxu0 0.0
    %323 = vmatpush1.msra.mxu0 0.0
    %324 = vmatprep.subr.mxu0 0.0
    %325 = vmatpush1.msra.mxu0 0.0
    %326 = vmatprep.subr.mxu0 0.0
    %327 = vmatpush1.msra.mxu0 %v101
    %328 = vmatprep.subr.mxu0 0.0
    %329 = vmatpush1.msra.mxu0 %v100
    %330 = vmatprep.subr.mxu0 0.0
    %331 = vmatpush2.msra.mxu0 0.0
    %332 = vmatprep.subr.mxu0 0.0
    %333 = vmatpush2.msra.mxu0 0.0
    %334 = vmatprep.subr.mxu0 0.0
    %335 = vmatpush2.msra.mxu0 0.0
    %336 = vmatprep.subr.mxu0 0.0
    %337 = vmatpush2.msra.mxu0 0.0
    %338 = vmatprep.subr.mxu0 0.0
    %339 = vmatpush2.msra.mxu0 0.0
    %340 = vmatprep.subr.mxu0 0.0
    %341 = vmatpush2.msra.mxu0 0.0
    %342 = vmatprep.subr.mxu0 0.0
    %343 = vmatpush2.msra.mxu0 0.0
    %344 = vmatprep.subr.mxu0 0.0
    %345 = vmatpush2.msra.mxu0 0.0
    %346 = vmatprep.subr.mxu0 0.0
    %347 = vmatpush2.msra.mxu0 0.0
    %348 = vmatprep.subr.mxu0 0.0
    %349 = vmatpush2.msra.mxu0 0.0
    %350 = vmatprep.subr.mxu0 0.0
    %351 = vmatpush2.msra.mxu0 0.0
    %352 = vmatprep.subr.mxu0 0.0
    %353 = vmatpush2.msra.mxu0 0.0
    %354 = vmatprep.subr.mxu0 0.0
    %355 = vmatpush2.msra.mxu0 0.0
    %356 = vmatprep.subr.mxu0 0.0
    %357 = vmatpush2.msra.mxu0 0.0
    %358 = vmatprep.subr.mxu0 0.0
    %359 = vmatpush2.msra.mxu0 0.0
    %360 = vmatprep.subr.mxu0 0.0
    %361 = vmatpush2.msra.mxu0 0.0
    %362 = vmatprep.mubr.f32.mxu0 0.0
    %363 = vmatmul.mubr.f32.gmra.mxu0 %v194
    %v364 = vpop.f32.mrf.mxu0
    %v365 = vadd.f32 0.0, %v364
    %v366 = vpop.f32.mrf.mxu0
    %367 = vdwg.mxu0
    %v369 = vrot.slane %v365, 2
    %370 = vrot.lane.b32.xlu0 %v369, 64
    %v371 = vpop.permute.xlu0 %370
    %v373 = vadd.f32 %v189, %v371
    %v375 = vlaneseq
    %v376 = vshrl.u32 %v375, 7
    %v377 = vsub.s32 0, %v376
    %v378 = vrot.slane %v103, %v377
    %379 = vrot.lane.b32.xlu0 %v378, 64
    %v380 = vpop.permute.xlu0 %379
    %v382 = vadd.f32 %v373, %v380
    %v383 = vxor.u32 %v382, 2147483648
    %v384 = vmul.f32 %v383, 1.442695
    %v385 = vpow.pop %v384
    %v386 = vadd.f32 %v385, 1.0
    %v387 = vrcp.pop %v386
    %v388 = vmul.f32 1.0, %v387
    %v389 = vtanh.pop %v382
    %v390 = vmul.f32 %v388, 0.0
    %392 = vrot.lane.b32.xlu0 %v389, 80
    %v393 = vpop.permute.xlu0 %392
    %v395 = vmul.f32 %v388, %v393
    %397 = vrot.lane.b32.xlu0 %v395, 16
    %v398 = vpop.permute.xlu0 %397
    %v400 = vadd.f32 %v390, %v398
    %v401 = vtanh.pop %v400
    %403 = vrot.lane.b32.xlu0 %v401, 16
    %v404 = vpop.permute.xlu0 %403
    %v406 = vmul.f32 %v388, %v404
    %408 = vrot.lane.b32.xlu0 %v297, 96
    %v409 = vpop.permute.xlu0 %408
    %v410 = vsel %vm192, %v409, 0
    %412 = vmatprep.subr.mxu0 0.0
    %413 = vmatpush1.msra.mxu0 0.0
    %414 = vmatprep.subr.mxu0 0.0
    %415 = vmatpush1.msra.mxu0 0.0
    %416 = vmatprep.subr.mxu0 0.0
    %417 = vmatpush1.msra.mxu0 0.0
    %418 = vmatprep.subr.mxu0 0.0
    %419 = vmatpush1.msra.mxu0 0.0
    %420 = vmatprep.subr.mxu0 0.0
    %421 = vmatpush1.msra.mxu0 0.0
    %422 = vmatprep.subr.mxu0 0.0
    %423 = vmatpush1.msra.mxu0 0.0
    %424 = vmatprep.subr.mxu0 0.0
    %425 = vmatpush1.msra.mxu0 0.0
    %426 = vmatprep.subr.mxu0 0.0
    %427 = vmatpush1.msra.mxu0 0.0
    %428 = vmatprep.subr.mxu0 0.0
    %429 = vmatpush1.msra.mxu0 0.0
    %430 = vmatprep.subr.mxu0 0.0
    %431 = vmatpush1.msra.mxu0 0.0
    %432 = vmatprep.subr.mxu0 0.0
    %433 = vmatpush1.msra.mxu0 0.0
    %434 = vmatprep.subr.mxu0 0.0
    %435 = vmatpush1.msra.mxu0 0.0
    %436 = vmatprep.subr.mxu0 0.0
    %437 = vmatpush1.msra.mxu0 0.0
    %438 = vmatprep.subr.mxu0 0.0
    %439 = vmatpush1.msra.mxu0 0.0
    %440 = vmatprep.subr.mxu0 0.0
    %441 = vmatpush1.msra.mxu0 %v99
    %442 = vmatprep.subr.mxu0 0.0
    %443 = vmatpush1.msra.mxu0 %v98
    %444 = vmatprep.subr.mxu0 0.0
    %445 = vmatpush2.msra.mxu0 0.0
    %446 = vmatprep.subr.mxu0 0.0
    %447 = vmatpush2.msra.mxu0 0.0
    %448 = vmatprep.subr.mxu0 0.0
    %449 = vmatpush2.msra.mxu0 0.0
    %450 = vmatprep.subr.mxu0 0.0
    %451 = vmatpush2.msra.mxu0 0.0
    %452 = vmatprep.subr.mxu0 0.0
    %453 = vmatpush2.msra.mxu0 0.0
    %454 = vmatprep.subr.mxu0 0.0
    %455 = vmatpush2.msra.mxu0 0.0
    %456 = vmatprep.subr.mxu0 0.0
    %457 = vmatpush2.msra.mxu0 0.0
    %458 = vmatprep.subr.mxu0 0.0
    %459 = vmatpush2.msra.mxu0 0.0
    %460 = vmatprep.subr.mxu0 0.0
    %461 = vmatpush2.msra.mxu0 0.0
    %462 = vmatprep.subr.mxu0 0.0
    %463 = vmatpush2.msra.mxu0 0.0
    %464 = vmatprep.subr.mxu0 0.0
    %465 = vmatpush2.msra.mxu0 0.0
    %466 = vmatprep.subr.mxu0 0.0
    %467 = vmatpush2.msra.mxu0 0.0
    %468 = vmatprep.subr.mxu0 0.0
    %469 = vmatpush2.msra.mxu0 0.0
    %470 = vmatprep.subr.mxu0 0.0
    %471 = vmatpush2.msra.mxu0 0.0
    %472 = vmatprep.subr.mxu0 0.0
    %473 = vmatpush2.msra.mxu0 0.0
    %474 = vmatprep.subr.mxu0 0.0
    %475 = vmatpush2.msra.mxu0 0.0
    %476 = vmatprep.mubr.f32.mxu0 0.0
    %477 = vmatmul.mubr.f32.gmra.mxu0 %v410
    %v478 = vpop.f32.mrf.mxu0
    %v479 = vadd.f32 0.0, %v478
    %v480 = vpop.f32.mrf.mxu0
    %481 = vdwg.mxu0
    %v483 = vrot.slane %v479, 6
    %v485 = vadd.f32 %v184, %v483
    %v486 = vadd.f32 %v485, %v271
    %v487 = vxor.u32 %v486, 2147483648
    %v488 = vmul.f32 %v487, 1.442695
    %v489 = vpow.pop %v488
    %v490 = vadd.f32 %v489, 1.0
    %v491 = vrcp.pop %v490
    %v492 = vmul.f32 1.0, %v491
    %v493 = vtanh.pop %v486
    %v495 = vrot.slane %v291, 6
    %v497 = vmul.f32 %v492, %v495
    %499 = vrot.lane.b32.xlu0 %v493, 80
    %v500 = vpop.permute.xlu0 %499
    %v502 = vmul.f32 %v492, %v500
    %504 = vrot.lane.b32.xlu0 %v502, 16
    %v505 = vpop.permute.xlu0 %504
    %v507 = vadd.f32 %v497, %v505
    %v508 = vtanh.pop %v507
    %510 = vrot.lane.b32.xlu0 %v508, 16
    %v511 = vpop.permute.xlu0 %510
    %v513 = vmul.f32 %v492, %v511
    %v515 = vrot.slane %v406, 6
    %516 = vrot.lane.b32.xlu0 %v515, 32
    %v517 = vpop.permute.xlu0 %516
    %v518 = vsel %vm192, %v517, 0
    %520 = vmatprep.subr.mxu0 0.0
    %521 = vmatpush1.msra.mxu0 0.0
    %522 = vmatprep.subr.mxu0 0.0
    %523 = vmatpush1.msra.mxu0 0.0
    %524 = vmatprep.subr.mxu0 0.0
    %525 = vmatpush1.msra.mxu0 0.0
    %526 = vmatprep.subr.mxu0 0.0
    %527 = vmatpush1.msra.mxu0 0.0
    %528 = vmatprep.subr.mxu0 0.0
    %529 = vmatpush1.msra.mxu0 0.0
    %530 = vmatprep.subr.mxu0 0.0
    %531 = vmatpush1.msra.mxu0 0.0
    %532 = vmatprep.subr.mxu0 0.0
    %533 = vmatpush1.msra.mxu0 0.0
    %534 = vmatprep.subr.mxu0 0.0
    %535 = vmatpush1.msra.mxu0 0.0
    %536 = vmatprep.subr.mxu0 0.0
    %537 = vmatpush1.msra.mxu0 0.0
    %538 = vmatprep.subr.mxu0 0.0
    %539 = vmatpush1.msra.mxu0 0.0
    %540 = vmatprep.subr.mxu0 0.0
    %541 = vmatpush1.msra.mxu0 0.0
    %542 = vmatprep.subr.mxu0 0.0
    %543 = vmatpush1.msra.mxu0 0.0
    %544 = vmatprep.subr.mxu0 0.0
    %545 = vmatpush1.msra.mxu0 0.0
    %546 = vmatprep.subr.mxu0 0.0
    %547 = vmatpush1.msra.mxu0 0.0
    %548 = vmatprep.subr.mxu0 0.0
    %549 = vmatpush1.msra.mxu0 %v101
    %550 = vmatprep.subr.mxu0 0.0
    %551 = vmatpush1.msra.mxu0 %v100
    %552 = vmatprep.subr.mxu0 0.0
    %553 = vmatpush2.msra.mxu0 0.0
    %554 = vmatprep.subr.mxu0 0.0
    %555 = vmatpush2.msra.mxu0 0.0
    %556 = vmatprep.subr.mxu0 0.0
    %557 = vmatpush2.msra.mxu0 0.0
    %558 = vmatprep.subr.mxu0 0.0
    %559 = vmatpush2.msra.mxu0 0.0
    %560 = vmatprep.subr.mxu0 0.0
    %561 = vmatpush2.msra.mxu0 0.0
    %562 = vmatprep.subr.mxu0 0.0
    %563 = vmatpush2.msra.mxu0 0.0
    %564 = vmatprep.subr.mxu0 0.0
    %565 = vmatpush2.msra.mxu0 0.0
    %566 = vmatprep.subr.mxu0 0.0
    %567 = vmatpush2.msra.mxu0 0.0
    %568 = vmatprep.subr.mxu0 0.0
    %569 = vmatpush2.msra.mxu0 0.0
    %570 = vmatprep.subr.mxu0 0.0
    %571 = vmatpush2.msra.mxu0 0.0
    %572 = vmatprep.subr.mxu0 0.0
    %573 = vmatpush2.msra.mxu0 0.0
    %574 = vmatprep.subr.mxu0 0.0
    %575 = vmatpush2.msra.mxu0 0.0
    %576 = vmatprep.subr.mxu0 0.0
    %577 = vmatpush2.msra.mxu0 0.0
    %578 = vmatprep.subr.mxu0 0.0
    %579 = vmatpush2.msra.mxu0 0.0
    %580 = vmatprep.subr.mxu0 0.0
    %581 = vmatpush2.msra.mxu0 0.0
    %582 = vmatprep.subr.mxu0 0.0
    %583 = vmatpush2.msra.mxu0 0.0
    %584 = vmatprep.mubr.f32.mxu0 0.0
    %585 = vmatmul.mubr.f32.gmra.mxu0 %v518
    %v586 = vpop.f32.mrf.mxu0
    %v587 = vadd.f32 0.0, %v586
    %v588 = vpop.f32.mrf.mxu0
    %589 = vdwg.mxu0
    %v591 = vrot.slane %v587, 4
    %592 = vrot.lane.b32.xlu0 %v591, 64
    %v593 = vpop.permute.xlu0 %592
    %v595 = vadd.f32 %v189, %v593
    %v596 = vadd.f32 %v595, %v380
    %v597 = vxor.u32 %v596, 2147483648
    %v598 = vmul.f32 %v597, 1.442695
    %v599 = vpow.pop %v598
    %v600 = vadd.f32 %v599, 1.0
    %v601 = vrcp.pop %v600
    %v602 = vmul.f32 1.0, %v601
    %v603 = vtanh.pop %v596
    %v605 = vrot.slane %v400, 2
    %v607 = vmul.f32 %v602, %v605
    %609 = vrot.lane.b32.xlu0 %v603, 80
    %v610 = vpop.permute.xlu0 %609
    %v612 = vmul.f32 %v602, %v610
    %614 = vrot.lane.b32.xlu0 %v612, 16
    %v615 = vpop.permute.xlu0 %614
    %v617 = vadd.f32 %v607, %v615
    %v618 = vtanh.pop %v617
    %620 = vrot.lane.b32.xlu0 %v618, 16
    %v621 = vpop.permute.xlu0 %620
    %v623 = vmul.f32 %v602, %v621
    %v625 = vrot.slane %v513, 2
    %626 = vrot.lane.b32.xlu0 %v625, 96
    %v627 = vpop.permute.xlu0 %626
    %v628 = vsel %vm192, %v627, 0
    %630 = vmatprep.subr.mxu0 0.0
    %631 = vmatpush1.msra.mxu0 0.0
    %632 = vmatprep.subr.mxu0 0.0
    %633 = vmatpush1.msra.mxu0 0.0
    %634 = vmatprep.subr.mxu0 0.0
    %635 = vmatpush1.msra.mxu0 0.0
    %636 = vmatprep.subr.mxu0 0.0
    %637 = vmatpush1.msra.mxu0 0.0
    %638 = vmatprep.subr.mxu0 0.0
    %639 = vmatpush1.msra.mxu0 0.0
    %640 = vmatprep.subr.mxu0 0.0
    %641 = vmatpush1.msra.mxu0 0.0
    %642 = vmatprep.subr.mxu0 0.0
    %643 = vmatpush1.msra.mxu0 0.0
    %644 = vmatprep.subr.mxu0 0.0
    %645 = vmatpush1.msra.mxu0 0.0
    %646 = vmatprep.subr.mxu0 0.0
    %647 = vmatpush1.msra.mxu0 0.0
    %648 = vmatprep.subr.mxu0 0.0
    %649 = vmatpush1.msra.mxu0 0.0
    %650 = vmatprep.subr.mxu0 0.0
    %651 = vmatpush1.msra.mxu0 0.0
    %652 = vmatprep.subr.mxu0 0.0
    %653 = vmatpush1.msra.mxu0 0.0
    %654 = vmatprep.subr.mxu0 0.0
    %655 = vmatpush1.msra.mxu0 0.0
    %656 = vmatprep.subr.mxu0 0.0
    %657 = vmatpush1.msra.mxu0 0.0
    %658 = vmatprep.subr.mxu0 0.0
    %659 = vmatpush1.msra.mxu0 %v99
    %660 = vmatprep.subr.mxu0 0.0
    %661 = vmatpush1.msra.mxu0 %v98
    %662 = vmatprep.subr.mxu0 0.0
    %663 = vmatpush2.msra.mxu0 0.0
    %664 = vmatprep.subr.mxu0 0.0
    %665 = vmatpush2.msra.mxu0 0.0
    %666 = vmatprep.subr.mxu0 0.0
    %667 = vmatpush2.msra.mxu0 0.0
    %668 = vmatprep.subr.mxu0 0.0
    %669 = vmatpush2.msra.mxu0 0.0
    %670 = vmatprep.subr.mxu0 0.0
    %671 = vmatpush2.msra.mxu0 0.0
    %672 = vmatprep.subr.mxu0 0.0
    %673 = vmatpush2.msra.mxu0 0.0
    %674 = vmatprep.subr.mxu0 0.0
    %675 = vmatpush2.msra.mxu0 0.0
    %676 = vmatprep.subr.mxu0 0.0
    %677 = vmatpush2.msra.mxu0 0.0
    %678 = vmatprep.subr.mxu0 0.0
    %679 = vmatpush2.msra.mxu0 0.0
    %680 = vmatprep.subr.mxu0 0.0
    %681 = vmatpush2.msra.mxu0 0.0
    %682 = vmatprep.subr.mxu0 0.0
    %683 = vmatpush2.msra.mxu0 0.0
    %684 = vmatprep.subr.mxu0 0.0
    %685 = vmatpush2.msra.mxu0 0.0
    %686 = vmatprep.subr.mxu0 0.0
    %687 = vmatpush2.msra.mxu0 0.0
    %688 = vmatprep.subr.mxu0 0.0
    %689 = vmatpush2.msra.mxu0 0.0
    %690 = vmatprep.subr.mxu0 0.0
    %691 = vmatpush2.msra.mxu0 0.0
    %692 = vmatprep.subr.mxu0 0.0
    %693 = vmatpush2.msra.mxu0 0.0
    %694 = vmatprep.mubr.f32.mxu0 0.0
    %695 = vmatmul.mubr.f32.gmra.mxu0 %v628
    %v696 = vpop.f32.mrf.mxu0
    %v697 = vadd.f32 0.0, %v696
    %v698 = vpop.f32.mrf.mxu0
    %699 = vdwg.mxu0
    %v701 = vrot.slane %v697, 4
    %v703 = vadd.f32 %v184, %v701
    %v704 = vadd.f32 %v703, %v271
    %v705 = vxor.u32 %v704, 2147483648
    %v706 = vmul.f32 %v705, 1.442695
    %v707 = vpow.pop %v706
    %v708 = vadd.f32 %v707, 1.0
    %v709 = vrcp.pop %v708
    %v710 = vmul.f32 1.0, %v709
    %v711 = vtanh.pop %v704
    %v713 = vrot.slane %v507, 6
    %v715 = vmul.f32 %v710, %v713
    %717 = vrot.lane.b32.xlu0 %v711, 80
    %v718 = vpop.permute.xlu0 %717
    %v720 = vmul.f32 %v710, %v718
    %722 = vrot.lane.b32.xlu0 %v720, 16
    %v723 = vpop.permute.xlu0 %722
    %v725 = vadd.f32 %v715, %v723
    %v726 = vtanh.pop %v725
    %728 = vrot.lane.b32.xlu0 %v726, 16
    %v729 = vpop.permute.xlu0 %728
    %v731 = vmul.f32 %v710, %v729
    %v733 = vrot.slane %v623, 4
    %734 = vrot.lane.b32.xlu0 %v733, 32
    %v735 = vpop.permute.xlu0 %734
    %v736 = vsel %vm192, %v735, 0
    %738 = vmatprep.subr.mxu0 0.0
    %739 = vmatpush1.msra.mxu0 0.0
    %740 = vmatprep.subr.mxu0 0.0
    %741 = vmatpush1.msra.mxu0 0.0
    %742 = vmatprep.subr.mxu0 0.0
    %743 = vmatpush1.msra.mxu0 0.0
    %744 = vmatprep.subr.mxu0 0.0
    %745 = vmatpush1.msra.mxu0 0.0
    %746 = vmatprep.subr.mxu0 0.0
    %747 = vmatpush1.msra.mxu0 0.0
    %748 = vmatprep.subr.mxu0 0.0
    %749 = vmatpush1.msra.mxu0 0.0
    %750 = vmatprep.subr.mxu0 0.0
    %751 = vmatpush1.msra.mxu0 0.0
    %752 = vmatprep.subr.mxu0 0.0
    %753 = vmatpush1.msra.mxu0 0.0
    %754 = vmatprep.subr.mxu0 0.0
    %755 = vmatpush1.msra.mxu0 0.0
    %756 = vmatprep.subr.mxu0 0.0
    %757 = vmatpush1.msra.mxu0 0.0
    %758 = vmatprep.subr.mxu0 0.0
    %759 = vmatpush1.msra.mxu0 0.0
    %760 = vmatprep.subr.mxu0 0.0
    %761 = vmatpush1.msra.mxu0 0.0
    %762 = vmatprep.subr.mxu0 0.0
    %763 = vmatpush1.msra.mxu0 0.0
    %764 = vmatprep.subr.mxu0 0.0
    %765 = vmatpush1.msra.mxu0 0.0
    %766 = vmatprep.subr.mxu0 0.0
    %767 = vmatpush1.msra.mxu0 %v101
    %768 = vmatprep.subr.mxu0 0.0
    %769 = vmatpush1.msra.mxu0 %v100
    %770 = vmatprep.subr.mxu0 0.0
    %771 = vmatpush2.msra.mxu0 0.0
    %772 = vmatprep.subr.mxu0 0.0
    %773 = vmatpush2.msra.mxu0 0.0
    %774 = vmatprep.subr.mxu0 0.0
    %775 = vmatpush2.msra.mxu0 0.0
    %776 = vmatprep.subr.mxu0 0.0
    %777 = vmatpush2.msra.mxu0 0.0
    %778 = vmatprep.subr.mxu0 0.0
    %779 = vmatpush2.msra.mxu0 0.0
    %780 = vmatprep.subr.mxu0 0.0
    %781 = vmatpush2.msra.mxu0 0.0
    %782 = vmatprep.subr.mxu0 0.0
    %783 = vmatpush2.msra.mxu0 0.0
    %784 = vmatprep.subr.mxu0 0.0
    %785 = vmatpush2.msra.mxu0 0.0
    %786 = vmatprep.subr.mxu0 0.0
    %787 = vmatpush2.msra.mxu0 0.0
    %788 = vmatprep.subr.mxu0 0.0
    %789 = vmatpush2.msra.mxu0 0.0
    %790 = vmatprep.subr.mxu0 0.0
    %791 = vmatpush2.msra.mxu0 0.0
    %792 = vmatprep.subr.mxu0 0.0
    %793 = vmatpush2.msra.mxu0 0.0
    %794 = vmatprep.subr.mxu0 0.0
    %795 = vmatpush2.msra.mxu0 0.0
    %796 = vmatprep.subr.mxu0 0.0
    %797 = vmatpush2.msra.mxu0 0.0
    %798 = vmatprep.subr.mxu0 0.0
    %799 = vmatpush2.msra.mxu0 0.0
    %800 = vmatprep.subr.mxu0 0.0
    %801 = vmatpush2.msra.mxu0 0.0
    %802 = vmatprep.mubr.f32.mxu0 0.0
    %803 = vmatmul.mubr.f32.gmra.mxu0 %v736
    %v804 = vpop.f32.mrf.mxu0
    %v805 = vadd.f32 0.0, %v804
    %v806 = vpop.f32.mrf.mxu0
    %807 = vdwg.mxu0
    %v809 = vrot.slane %v805, 6
    %810 = vrot.lane.b32.xlu0 %v809, 64
    %v811 = vpop.permute.xlu0 %810
    %v813 = vadd.f32 %v189, %v811
    %v814 = vadd.f32 %v813, %v380
    %v815 = vxor.u32 %v814, 2147483648
    %v816 = vmul.f32 %v815, 1.442695
    %v817 = vpow.pop %v816
    %v818 = vadd.f32 %v817, 1.0
    %v819 = vrcp.pop %v818
    %v820 = vmul.f32 1.0, %v819
    %v821 = vtanh.pop %v814
    %v823 = vrot.slane %v617, 2
    %v825 = vmul.f32 %v820, %v823
    %827 = vrot.lane.b32.xlu0 %v821, 80
    %v828 = vpop.permute.xlu0 %827
    %v830 = vmul.f32 %v820, %v828
    %832 = vrot.lane.b32.xlu0 %v830, 16
    %v833 = vpop.permute.xlu0 %832
    %v835 = vadd.f32 %v825, %v833
    %v836 = vtanh.pop %v835
    %838 = vrot.lane.b32.xlu0 %v836, 16
    %v839 = vpop.permute.xlu0 %838
    %v841 = vmul.f32 %v820, %v839
    %v843 = vrot.slane %v731, 4
    %844 = vrot.lane.b32.xlu0 %v843, 96
    %v845 = vpop.permute.xlu0 %844
    %v846 = vsel %vm192, %v845, 0
    %848 = vmatprep.subr.mxu0 0.0
    %849 = vmatpush1.msra.mxu0 0.0
    %850 = vmatprep.subr.mxu0 0.0
    %851 = vmatpush1.msra.mxu0 0.0
    %852 = vmatprep.subr.mxu0 0.0
    %853 = vmatpush1.msra.mxu0 0.0
    %854 = vmatprep.subr.mxu0 0.0
    %855 = vmatpush1.msra.mxu0 0.0
    %856 = vmatprep.subr.mxu0 0.0
    %857 = vmatpush1.msra.mxu0 0.0
    %858 = vmatprep.subr.mxu0 0.0
    %859 = vmatpush1.msra.mxu0 0.0
    %860 = vmatprep.subr.mxu0 0.0
    %861 = vmatpush1.msra.mxu0 0.0
    %862 = vmatprep.subr.mxu0 0.0
    %863 = vmatpush1.msra.mxu0 0.0
    %864 = vmatprep.subr.mxu0 0.0
    %865 = vmatpush1.msra.mxu0 0.0
    %866 = vmatprep.subr.mxu0 0.0
    %867 = vmatpush1.msra.mxu0 0.0
    %868 = vmatprep.subr.mxu0 0.0
    %869 = vmatpush1.msra.mxu0 0.0
    %870 = vmatprep.subr.mxu0 0.0
    %871 = vmatpush1.msra.mxu0 0.0
    %872 = vmatprep.subr.mxu0 0.0
    %873 = vmatpush1.msra.mxu0 0.0
    %874 = vmatprep.subr.mxu0 0.0
    %875 = vmatpush1.msra.mxu0 0.0
    %876 = vmatprep.subr.mxu0 0.0
    %877 = vmatpush1.msra.mxu0 %v99
    %878 = vmatprep.subr.mxu0 0.0
    %879 = vmatpush1.msra.mxu0 %v98
    %880 = vmatprep.subr.mxu0 0.0
    %881 = vmatpush2.msra.mxu0 0.0
    %882 = vmatprep.subr.mxu0 0.0
    %883 = vmatpush2.msra.mxu0 0.0
    %884 = vmatprep.subr.mxu0 0.0
    %885 = vmatpush2.msra.mxu0 0.0
    %886 = vmatprep.subr.mxu0 0.0
    %887 = vmatpush2.msra.mxu0 0.0
    %888 = vmatprep.subr.mxu0 0.0
    %889 = vmatpush2.msra.mxu0 0.0
    %890 = vmatprep.subr.mxu0 0.0
    %891 = vmatpush2.msra.mxu0 0.0
    %892 = vmatprep.subr.mxu0 0.0
    %893 = vmatpush2.msra.mxu0 0.0
    %894 = vmatprep.subr.mxu0 0.0
    %895 = vmatpush2.msra.mxu0 0.0
    %896 = vmatprep.subr.mxu0 0.0
    %897 = vmatpush2.msra.mxu0 0.0
    %898 = vmatprep.subr.mxu0 0.0
    %899 = vmatpush2.msra.mxu0 0.0
    %900 = vmatprep.subr.mxu0 0.0
    %901 = vmatpush2.msra.mxu0 0.0
    %902 = vmatprep.subr.mxu0 0.0
    %903 = vmatpush2.msra.mxu0 0.0
    %904 = vmatprep.subr.mxu0 0.0
    %905 = vmatpush2.msra.mxu0 0.0
    %906 = vmatprep.subr.mxu0 0.0
    %907 = vmatpush2.msra.mxu0 0.0
    %908 = vmatprep.subr.mxu0 0.0
    %909 = vmatpush2.msra.mxu0 0.0
    %910 = vmatprep.subr.mxu0 0.0
    %911 = vmatpush2.msra.mxu0 0.0
    %912 = vmatprep.mubr.f32.mxu0 0.0
    %913 = vmatmul.mubr.f32.gmra.mxu0 %v846
    %v914 = vpop.f32.mrf.mxu0
    %v915 = vadd.f32 0.0, %v914
    %v916 = vpop.f32.mrf.mxu0
    %917 = vdwg.mxu0
    %v919 = vrot.slane %v915, 2
    %v921 = vadd.f32 %v184, %v919
    %v922 = vadd.f32 %v921, %v271
    %v923 = vxor.u32 %v922, 2147483648
    %v924 = vmul.f32 %v923, 1.442695
    %v925 = vpow.pop %v924
    %v926 = vadd.f32 %v925, 1.0
    %v927 = vrcp.pop %v926
    %v928 = vmul.f32 1.0, %v927
    %v929 = vtanh.pop %v922
    %v931 = vrot.slane %v725, 6
    %v933 = vmul.f32 %v928, %v931
    %935 = vrot.lane.b32.xlu0 %v929, 80
    %v936 = vpop.permute.xlu0 %935
    %v938 = vmul.f32 %v928, %v936
    %940 = vrot.lane.b32.xlu0 %v938, 16
    %v941 = vpop.permute.xlu0 %940
    %v943 = vadd.f32 %v933, %v941
    %v944 = vtanh.pop %v943
    %946 = vrot.lane.b32.xlu0 %v944, 16
    %v947 = vpop.permute.xlu0 %946
    %v949 = vmul.f32 %v928, %v947
    %v951 = vrot.slane %v841, 2
    %952 = vrot.lane.b32.xlu0 %v951, 32
    %v953 = vpop.permute.xlu0 %952
    %v954 = vsel %vm192, %v953, 0
    %956 = vmatprep.subr.mxu0 0.0
    %957 = vmatpush1.msra.mxu0 0.0
    %958 = vmatprep.subr.mxu0 0.0
    %959 = vmatpush1.msra.mxu0 0.0
    %960 = vmatprep.subr.mxu0 0.0
    %961 = vmatpush1.msra.mxu0 0.0
    %962 = vmatprep.subr.mxu0 0.0
    %963 = vmatpush1.msra.mxu0 0.0
    %964 = vmatprep.subr.mxu0 0.0
    %965 = vmatpush1.msra.mxu0 0.0
    %966 = vmatprep.subr.mxu0 0.0
    %967 = vmatpush1.msra.mxu0 0.0
    %968 = vmatprep.subr.mxu0 0.0
    %969 = vmatpush1.msra.mxu0 0.0
    %970 = vmatprep.subr.mxu0 0.0
    %971 = vmatpush1.msra.mxu0 0.0
    %972 = vmatprep.subr.mxu0 0.0
    %973 = vmatpush1.msra.mxu0 0.0
    %974 = vmatprep.subr.mxu0 0.0
    %975 = vmatpush1.msra.mxu0 0.0
    %976 = vmatprep.subr.mxu0 0.0
    %977 = vmatpush1.msra.mxu0 0.0
    %978 = vmatprep.subr.mxu0 0.0
    %979 = vmatpush1.msra.mxu0 0.0
    %980 = vmatprep.subr.mxu0 0.0
    %981 = vmatpush1.msra.mxu0 0.0
    %982 = vmatprep.subr.mxu0 0.0
    %983 = vmatpush1.msra.mxu0 0.0
    %984 = vmatprep.subr.mxu0 0.0
    %985 = vmatpush1.msra.mxu0 %v101
    %986 = vmatprep.subr.mxu0 0.0
    %987 = vmatpush1.msra.mxu0 %v100
    %988 = vmatprep.subr.mxu0 0.0
    %989 = vmatpush2.msra.mxu0 0.0
    %990 = vmatprep.subr.mxu0 0.0
    %991 = vmatpush2.msra.mxu0 0.0
    %992 = vmatprep.subr.mxu0 0.0
    %993 = vmatpush2.msra.mxu0 0.0
    %994 = vmatprep.subr.mxu0 0.0
    %995 = vmatpush2.msra.mxu0 0.0
    %996 = vmatprep.subr.mxu0 0.0
    %997 = vmatpush2.msra.mxu0 0.0
    %998 = vmatprep.subr.mxu0 0.0
    %999 = vmatpush2.msra.mxu0 0.0
    %1000 = vmatprep.subr.mxu0 0.0
    %1001 = vmatpush2.msra.mxu0 0.0
    %1002 = vmatprep.subr.mxu0 0.0
    %1003 = vmatpush2.msra.mxu0 0.0
    %1004 = vmatprep.subr.mxu0 0.0
    %1005 = vmatpush2.msra.mxu0 0.0
    %1006 = vmatprep.subr.mxu0 0.0
    %1007 = vmatpush2.msra.mxu0 0.0
    %1008 = vmatprep.subr.mxu0 0.0
    %1009 = vmatpush2.msra.mxu0 0.0
    %1010 = vmatprep.subr.mxu0 0.0
    %1011 = vmatpush2.msra.mxu0 0.0
    %1012 = vmatprep.subr.mxu0 0.0
    %1013 = vmatpush2.msra.mxu0 0.0
    %1014 = vmatprep.subr.mxu0 0.0
    %1015 = vmatpush2.msra.mxu0 0.0
    %1016 = vmatprep.subr.mxu0 0.0
    %1017 = vmatpush2.msra.mxu0 0.0
    %1018 = vmatprep.subr.mxu0 0.0
    %1019 = vmatpush2.msra.mxu0 0.0
    %1020 = vmatprep.mubr.f32.mxu0 0.0
    %1021 = vmatmul.mubr.f32.gmra.mxu0 %v954
    %v1022 = vpop.f32.mrf.mxu0
    %v1023 = vadd.f32 0.0, %v1022
    %v1024 = vpop.f32.mrf.mxu0
    %1025 = vdwg.mxu0
    %1027 = vrot.lane.b32.xlu0 %v1023, 64
    %v1028 = vpop.permute.xlu0 %1027
    %v1030 = vadd.f32 %v189, %v1028
    %v1031 = vadd.f32 %v1030, %v380
    %v1032 = vxor.u32 %v1031, 2147483648
    %v1033 = vmul.f32 %v1032, 1.442695
    %v1034 = vpow.pop %v1033
    %v1035 = vadd.f32 %v1034, 1.0
    %v1036 = vrcp.pop %v1035
    %v1037 = vmul.f32 1.0, %v1036
    %v1038 = vtanh.pop %v1031
    %v1040 = vrot.slane %v835, 2
    %v1042 = vmul.f32 %v1037, %v1040
    %1044 = vrot.lane.b32.xlu0 %v1038, 80
    %v1045 = vpop.permute.xlu0 %1044
    %v1047 = vmul.f32 %v1037, %v1045
    %1049 = vrot.lane.b32.xlu0 %v1047, 16
    %v1050 = vpop.permute.xlu0 %1049
    %v1052 = vadd.f32 %v1042, %v1050
    %v1053 = vtanh.pop %v1052
    %1055 = vrot.lane.b32.xlu0 %v1053, 16
    %v1056 = vpop.permute.xlu0 %1055
    %v1058 = vmul.f32 %v1037, %v1056
    %v1060 = vrot.slane %v949, 6
    %1061 = vrot.lane.b32.xlu0 %v1060, 96
    %v1062 = vpop.permute.xlu0 %1061
    %v1063 = vsel %vm192, %v1062, 0
    %1065 = vmatprep.subr.mxu0 0.0
    %1066 = vmatpush1.msra.mxu0 0.0
    %1067 = vmatprep.subr.mxu0 0.0
    %1068 = vmatpush1.msra.mxu0 0.0
    %1069 = vmatprep.subr.mxu0 0.0
    %1070 = vmatpush1.msra.mxu0 0.0
    %1071 = vmatprep.subr.mxu0 0.0
    %1072 = vmatpush1.msra.mxu0 0.0
    %1073 = vmatprep.subr.mxu0 0.0
    %1074 = vmatpush1.msra.mxu0 0.0
    %1075 = vmatprep.subr.mxu0 0.0
    %1076 = vmatpush1.msra.mxu0 0.0
    %1077 = vmatprep.subr.mxu0 0.0
    %1078 = vmatpush1.msra.mxu0 0.0
    %1079 = vmatprep.subr.mxu0 0.0
    %1080 = vmatpush1.msra.mxu0 0.0
    %1081 = vmatprep.subr.mxu0 0.0
    %1082 = vmatpush1.msra.mxu0 0.0
    %1083 = vmatprep.subr.mxu0 0.0
    %1084 = vmatpush1.msra.mxu0 0.0
    %1085 = vmatprep.subr.mxu0 0.0
    %1086 = vmatpush1.msra.mxu0 0.0
    %1087 = vmatprep.subr.mxu0 0.0
    %1088 = vmatpush1.msra.mxu0 0.0
    %1089 = vmatprep.subr.mxu0 0.0
    %1090 = vmatpush1.msra.mxu0 0.0
    %1091 = vmatprep.subr.mxu0 0.0
    %1092 = vmatpush1.msra.mxu0 0.0
    %1093 = vmatprep.subr.mxu0 0.0
    %1094 = vmatpush1.msra.mxu0 %v99
    %1095 = vmatprep.subr.mxu0 0.0
    %1096 = vmatpush1.msra.mxu0 %v98
    %1097 = vmatprep.subr.mxu0 0.0
    %1098 = vmatpush2.msra.mxu0 0.0
    %1099 = vmatprep.subr.mxu0 0.0
    %1100 = vmatpush2.msra.mxu0 0.0
    %1101 = vmatprep.subr.mxu0 0.0
    %1102 = vmatpush2.msra.mxu0 0.0
    %1103 = vmatprep.subr.mxu0 0.0
    %1104 = vmatpush2.msra.mxu0 0.0
    %1105 = vmatprep.subr.mxu0 0.0
    %1106 = vmatpush2.msra.mxu0 0.0
    %1107 = vmatprep.subr.mxu0 0.0
    %1108 = vmatpush2.msra.mxu0 0.0
    %1109 = vmatprep.subr.mxu0 0.0
    %1110 = vmatpush2.msra.mxu0 0.0
    %1111 = vmatprep.subr.mxu0 0.0
    %1112 = vmatpush2.msra.mxu0 0.0
    %1113 = vmatprep.subr.mxu0 0.0
    %1114 = vmatpush2.msra.mxu0 0.0
    %1115 = vmatprep.subr.mxu0 0.0
    %1116 = vmatpush2.msra.mxu0 0.0
    %1117 = vmatprep.subr.mxu0 0.0
    %1118 = vmatpush2.msra.mxu0 0.0
    %1119 = vmatprep.subr.mxu0 0.0
    %1120 = vmatpush2.msra.mxu0 0.0
    %1121 = vmatprep.subr.mxu0 0.0
    %1122 = vmatpush2.msra.mxu0 0.0
    %1123 = vmatprep.subr.mxu0 0.0
    %1124 = vmatpush2.msra.mxu0 0.0
    %1125 = vmatprep.subr.mxu0 0.0
    %1126 = vmatpush2.msra.mxu0 0.0
    %1127 = vmatprep.subr.mxu0 0.0
    %1128 = vmatpush2.msra.mxu0 0.0
    %1129 = vmatprep.mubr.f32.mxu0 0.0
    %1130 = vmatmul.mubr.f32.gmra.mxu0 %v1063
    %v1131 = vpop.f32.mrf.mxu0
    %v1132 = vadd.f32 0.0, %v1131
    %v1133 = vpop.f32.mrf.mxu0
    %1134 = vdwg.mxu0
    %v1135 = vadd.f32 %v189, %v1132
    %v1136 = vadd.f32 %v1135, %v271
    %v1137 = vxor.u32 %v1136, 2147483648
    %v1138 = vmul.f32 %v1137, 1.442695
    %v1139 = vpow.pop %v1138
    %v1140 = vadd.f32 %v1139, 1.0
    %v1141 = vrcp.pop %v1140
    %v1142 = vmul.f32 1.0, %v1141
    %v1143 = vtanh.pop %v1136
    %v1145 = vrot.slane %v943, 6
    %v1147 = vmul.f32 %v1142, %v1145
    %1149 = vrot.lane.b32.xlu0 %v1143, 80
    %v1150 = vpop.permute.xlu0 %1149
    %v1152 = vmul.f32 %v1142, %v1150
    %1154 = vrot.lane.b32.xlu0 %v1152, 16
    %v1155 = vpop.permute.xlu0 %1154
    %v1157 = vadd.f32 %v1147, %v1155
    %v1158 = vtanh.pop %v1157
    %1160 = vrot.lane.b32.xlu0 %v1158, 16
    %v1161 = vpop.permute.xlu0 %1160
    %v1163 = vmul.f32 %v1142, %v1161
    %1165 = vrot.lane.b32.xlu0 %v1058, 32
    %v1166 = vpop.permute.xlu0 %1165
    %v1167 = vsel %vm192, %v1166, 0
    %1169 = vmatprep.subr.mxu0 0.0
    %1170 = vmatpush1.msra.mxu0 0.0
    %1171 = vmatprep.subr.mxu0 0.0
    %1172 = vmatpush1.msra.mxu0 0.0
    %1173 = vmatprep.subr.mxu0 0.0
    %1174 = vmatpush1.msra.mxu0 0.0
    %1175 = vmatprep.subr.mxu0 0.0
    %1176 = vmatpush1.msra.mxu0 0.0
    %1177 = vmatprep.subr.mxu0 0.0
    %1178 = vmatpush1.msra.mxu0 0.0
    %1179 = vmatprep.subr.mxu0 0.0
    %1180 = vmatpush1.msra.mxu0 0.0
    %1181 = vmatprep.subr.mxu0 0.0
    %1182 = vmatpush1.msra.mxu0 0.0
    %1183 = vmatprep.subr.mxu0 0.0
    %1184 = vmatpush1.msra.mxu0 0.0
    %1185 = vmatprep.subr.mxu0 0.0
    %1186 = vmatpush1.msra.mxu0 0.0
    %1187 = vmatprep.subr.mxu0 0.0
    %1188 = vmatpush1.msra.mxu0 0.0
    %1189 = vmatprep.subr.mxu0 0.0
    %1190 = vmatpush1.msra.mxu0 0.0
    %1191 = vmatprep.subr.mxu0 0.0
    %1192 = vmatpush1.msra.mxu0 0.0
    %1193 = vmatprep.subr.mxu0 0.0
    %1194 = vmatpush1.msra.mxu0 0.0
    %1195 = vmatprep.subr.mxu0 0.0
    %1196 = vmatpush1.msra.mxu0 0.0
    %1197 = vmatprep.subr.mxu0 0.0
    %1198 = vmatpush1.msra.mxu0 %v101
    %1199 = vmatprep.subr.mxu0 0.0
    %1200 = vmatpush1.msra.mxu0 %v100
    %1201 = vmatprep.subr.mxu0 0.0
    %1202 = vmatpush2.msra.mxu0 0.0
    %1203 = vmatprep.subr.mxu0 0.0
    %1204 = vmatpush2.msra.mxu0 0.0
    %1205 = vmatprep.subr.mxu0 0.0
    %1206 = vmatpush2.msra.mxu0 0.0
    %1207 = vmatprep.subr.mxu0 0.0
    %1208 = vmatpush2.msra.mxu0 0.0
    %1209 = vmatprep.subr.mxu0 0.0
    %1210 = vmatpush2.msra.mxu0 0.0
    %1211 = vmatprep.subr.mxu0 0.0
    %1212 = vmatpush2.msra.mxu0 0.0
    %1213 = vmatprep.subr.mxu0 0.0
    %1214 = vmatpush2.msra.mxu0 0.0
    %1215 = vmatprep.subr.mxu0 0.0
    %1216 = vmatpush2.msra.mxu0 0.0
    %1217 = vmatprep.subr.mxu0 0.0
    %1218 = vmatpush2.msra.mxu0 0.0
    %1219 = vmatprep.subr.mxu0 0.0
    %1220 = vmatpush2.msra.mxu0 0.0
    %1221 = vmatprep.subr.mxu0 0.0
    %1222 = vmatpush2.msra.mxu0 0.0
    %1223 = vmatprep.subr.mxu0 0.0
    %1224 = vmatpush2.msra.mxu0 0.0
    %1225 = vmatprep.subr.mxu0 0.0
    %1226 = vmatpush2.msra.mxu0 0.0
    %1227 = vmatprep.subr.mxu0 0.0
    %1228 = vmatpush2.msra.mxu0 0.0
    %1229 = vmatprep.subr.mxu0 0.0
    %1230 = vmatpush2.msra.mxu0 0.0
    %1231 = vmatprep.subr.mxu0 0.0
    %1232 = vmatpush2.msra.mxu0 0.0
    %1233 = vmatprep.mubr.f32.mxu0 0.0
    %1234 = vmatmul.mubr.f32.gmra.mxu0 %v1167
    %v1235 = vpop.f32.mrf.mxu0
    %v1236 = vadd.f32 0.0, %v1235
    %v1237 = vpop.f32.mrf.mxu0
    %1238 = vdwg.mxu0
    %v1240 = vrot.slane %v1236, 2
    %1241 = vrot.lane.b32.xlu0 %v1240, 64
    %v1242 = vpop.permute.xlu0 %1241
    %v1244 = vadd.f32 %v184, %v1242
    %v1245 = vadd.f32 %v1244, %v380
    %v1246 = vxor.u32 %v1245, 2147483648
    %v1247 = vmul.f32 %v1246, 1.442695
    %v1248 = vpow.pop %v1247
    %v1249 = vadd.f32 %v1248, 1.0
    %v1250 = vrcp.pop %v1249
    %v1251 = vmul.f32 1.0, %v1250
    %v1252 = vtanh.pop %v1245
    %v1254 = vrot.slane %v1052, 2
    %v1256 = vmul.f32 %v1251, %v1254
    %1258 = vrot.lane.b32.xlu0 %v1252, 80
    %v1259 = vpop.permute.xlu0 %1258
    %v1261 = vmul.f32 %v1251, %v1259
    %1263 = vrot.lane.b32.xlu0 %v1261, 16
    %v1264 = vpop.permute.xlu0 %1263
    %v1266 = vadd.f32 %v1256, %v1264
    %v1267 = vtanh.pop %v1266
    %1269 = vrot.lane.b32.xlu0 %v1267, 16
    %v1270 = vpop.permute.xlu0 %1269
    %v1272 = vmul.f32 %v1251, %v1270
    %1274 = vrot.lane.b32.xlu0 %v1163, 96
    %v1275 = vpop.permute.xlu0 %1274
    %v1276 = vsel %vm192, %v1275, 0
    %1278 = vmatprep.subr.mxu0 0.0
    %1279 = vmatpush1.msra.mxu0 0.0
    %1280 = vmatprep.subr.mxu0 0.0
    %1281 = vmatpush1.msra.mxu0 0.0
    %1282 = vmatprep.subr.mxu0 0.0
    %1283 = vmatpush1.msra.mxu0 0.0
    %1284 = vmatprep.subr.mxu0 0.0
    %1285 = vmatpush1.msra.mxu0 0.0
    %1286 = vmatprep.subr.mxu0 0.0
    %1287 = vmatpush1.msra.mxu0 0.0
    %1288 = vmatprep.subr.mxu0 0.0
    %1289 = vmatpush1.msra.mxu0 0.0
    %1290 = vmatprep.subr.mxu0 0.0
    %1291 = vmatpush1.msra.mxu0 0.0
    %1292 = vmatprep.subr.mxu0 0.0
    %1293 = vmatpush1.msra.mxu0 0.0
    %1294 = vmatprep.subr.mxu0 0.0
    %1295 = vmatpush1.msra.mxu0 0.0
    %1296 = vmatprep.subr.mxu0 0.0
    %1297 = vmatpush1.msra.mxu0 0.0
    %1298 = vmatprep.subr.mxu0 0.0
    %1299 = vmatpush1.msra.mxu0 0.0
    %1300 = vmatprep.subr.mxu0 0.0
    %1301 = vmatpush1.msra.mxu0 0.0
    %1302 = vmatprep.subr.mxu0 0.0
    %1303 = vmatpush1.msra.mxu0 0.0
    %1304 = vmatprep.subr.mxu0 0.0
    %1305 = vmatpush1.msra.mxu0 0.0
    %1306 = vmatprep.subr.mxu0 0.0
    %1307 = vmatpush1.msra.mxu0 %v99
    %1308 = vmatprep.subr.mxu0 0.0
    %1309 = vmatpush1.msra.mxu0 %v98
    %1310 = vmatprep.subr.mxu0 0.0
    %1311 = vmatpush2.msra.mxu0 0.0
    %1312 = vmatprep.subr.mxu0 0.0
    %1313 = vmatpush2.msra.mxu0 0.0
    %1314 = vmatprep.subr.mxu0 0.0
    %1315 = vmatpush2.msra.mxu0 0.0
    %1316 = vmatprep.subr.mxu0 0.0
    %1317 = vmatpush2.msra.mxu0 0.0
    %1318 = vmatprep.subr.mxu0 0.0
    %1319 = vmatpush2.msra.mxu0 0.0
    %1320 = vmatprep.subr.mxu0 0.0
    %1321 = vmatpush2.msra.mxu0 0.0
    %1322 = vmatprep.subr.mxu0 0.0
    %1323 = vmatpush2.msra.mxu0 0.0
    %1324 = vmatprep.subr.mxu0 0.0
    %1325 = vmatpush2.msra.mxu0 0.0
    %1326 = vmatprep.subr.mxu0 0.0
    %1327 = vmatpush2.msra.mxu0 0.0
    %1328 = vmatprep.subr.mxu0 0.0
    %1329 = vmatpush2.msra.mxu0 0.0
    %1330 = vmatprep.subr.mxu0 0.0
    %1331 = vmatpush2.msra.mxu0 0.0
    %1332 = vmatprep.subr.mxu0 0.0
    %1333 = vmatpush2.msra.mxu0 0.0
    %1334 = vmatprep.subr.mxu0 0.0
    %1335 = vmatpush2.msra.mxu0 0.0
    %1336 = vmatprep.subr.mxu0 0.0
    %1337 = vmatpush2.msra.mxu0 0.0
    %1338 = vmatprep.subr.mxu0 0.0
    %1339 = vmatpush2.msra.mxu0 0.0
    %1340 = vmatprep.subr.mxu0 0.0
    %1341 = vmatpush2.msra.mxu0 0.0
    %1342 = vmatprep.mubr.f32.mxu0 0.0
    %1343 = vmatmul.mubr.f32.gmra.mxu0 %v1276
    %v1344 = vpop.f32.mrf.mxu0
    %v1345 = vadd.f32 0.0, %v1344
    %v1346 = vpop.f32.mrf.mxu0
    %1347 = vdwg.mxu0
    %v1349 = vrot.slane %v1345, 6
    %v1351 = vadd.f32 %v189, %v1349
    %v1352 = vadd.f32 %v1351, %v271
    %v1353 = vxor.u32 %v1352, 2147483648
    %v1354 = vmul.f32 %v1353, 1.442695
    %v1355 = vpow.pop %v1354
    %v1356 = vadd.f32 %v1355, 1.0
    %v1357 = vrcp.pop %v1356
    %v1358 = vmul.f32 1.0, %v1357
    %v1359 = vtanh.pop %v1352
    %v1361 = vrot.slane %v1157, 6
    %v1363 = vmul.f32 %v1358, %v1361
    %1365 = vrot.lane.b32.xlu0 %v1359, 80
    %v1366 = vpop.permute.xlu0 %1365
    %v1368 = vmul.f32 %v1358, %v1366
    %1370 = vrot.lane.b32.xlu0 %v1368, 16
    %v1371 = vpop.permute.xlu0 %1370
    %v1373 = vadd.f32 %v1363, %v1371
    %v1374 = vtanh.pop %v1373
    %1376 = vrot.lane.b32.xlu0 %v1374, 16
    %v1377 = vpop.permute.xlu0 %1376
    %v1379 = vmul.f32 %v1358, %v1377
    %v1381 = vrot.slane %v1272, 6
    %1382 = vrot.lane.b32.xlu0 %v1381, 32
    %v1383 = vpop.permute.xlu0 %1382
    %v1384 = vsel %vm192, %v1383, 0
    %1386 = vmatprep.subr.mxu0 0.0
    %1387 = vmatpush1.msra.mxu0 0.0
    %1388 = vmatprep.subr.mxu0 0.0
    %1389 = vmatpush1.msra.mxu0 0.0
    %1390 = vmatprep.subr.mxu0 0.0
    %1391 = vmatpush1.msra.mxu0 0.0
    %1392 = vmatprep.subr.mxu0 0.0
    %1393 = vmatpush1.msra.mxu0 0.0
    %1394 = vmatprep.subr.mxu0 0.0
    %1395 = vmatpush1.msra.mxu0 0.0
    %1396 = vmatprep.subr.mxu0 0.0
    %1397 = vmatpush1.msra.mxu0 0.0
    %1398 = vmatprep.subr.mxu0 0.0
    %1399 = vmatpush1.msra.mxu0 0.0
    %1400 = vmatprep.subr.mxu0 0.0
    %1401 = vmatpush1.msra.mxu0 0.0
    %1402 = vmatprep.subr.mxu0 0.0
    %1403 = vmatpush1.msra.mxu0 0.0
    %1404 = vmatprep.subr.mxu0 0.0
    %1405 = vmatpush1.msra.mxu0 0.0
    %1406 = vmatprep.subr.mxu0 0.0
    %1407 = vmatpush1.msra.mxu0 0.0
    %1408 = vmatprep.subr.mxu0 0.0
    %1409 = vmatpush1.msra.mxu0 0.0
    %1410 = vmatprep.subr.mxu0 0.0
    %1411 = vmatpush1.msra.mxu0 0.0
    %1412 = vmatprep.subr.mxu0 0.0
    %1413 = vmatpush1.msra.mxu0 0.0
    %1414 = vmatprep.subr.mxu0 0.0
    %1415 = vmatpush1.msra.mxu0 %v101
    %1416 = vmatprep.subr.mxu0 0.0
    %1417 = vmatpush1.msra.mxu0 %v100
    %1418 = vmatprep.subr.mxu0 0.0
    %1419 = vmatpush2.msra.mxu0 0.0
    %1420 = vmatprep.subr.mxu0 0.0
    %1421 = vmatpush2.msra.mxu0 0.0
    %1422 = vmatprep.subr.mxu0 0.0
    %1423 = vmatpush2.msra.mxu0 0.0
    %1424 = vmatprep.subr.mxu0 0.0
    %1425 = vmatpush2.msra.mxu0 0.0
    %1426 = vmatprep.subr.mxu0 0.0
    %1427 = vmatpush2.msra.mxu0 0.0
    %1428 = vmatprep.subr.mxu0 0.0
    %1429 = vmatpush2.msra.mxu0 0.0
    %1430 = vmatprep.subr.mxu0 0.0
    %1431 = vmatpush2.msra.mxu0 0.0
    %1432 = vmatprep.subr.mxu0 0.0
    %1433 = vmatpush2.msra.mxu0 0.0
    %1434 = vmatprep.subr.mxu0 0.0
    %1435 = vmatpush2.msra.mxu0 0.0
    %1436 = vmatprep.subr.mxu0 0.0
    %1437 = vmatpush2.msra.mxu0 0.0
    %1438 = vmatprep.subr.mxu0 0.0
    %1439 = vmatpush2.msra.mxu0 0.0
    %1440 = vmatprep.subr.mxu0 0.0
    %1441 = vmatpush2.msra.mxu0 0.0
    %1442 = vmatprep.subr.mxu0 0.0
    %1443 = vmatpush2.msra.mxu0 0.0
    %1444 = vmatprep.subr.mxu0 0.0
    %1445 = vmatpush2.msra.mxu0 0.0
    %1446 = vmatprep.subr.mxu0 0.0
    %1447 = vmatpush2.msra.mxu0 0.0
    %1448 = vmatprep.subr.mxu0 0.0
    %1449 = vmatpush2.msra.mxu0 0.0
    %1450 = vmatprep.mubr.f32.mxu0 0.0
    %1451 = vmatmul.mubr.f32.gmra.mxu0 %v1384
    %v1452 = vpop.f32.mrf.mxu0
    %v1453 = vadd.f32 0.0, %v1452
    %v1454 = vpop.f32.mrf.mxu0
    %1455 = vdwg.mxu0
    %v1457 = vrot.slane %v1453, 4
    %1458 = vrot.lane.b32.xlu0 %v1457, 64
    %v1459 = vpop.permute.xlu0 %1458
    %v1461 = vadd.f32 %v184, %v1459
    %v1462 = vadd.f32 %v1461, %v380
    %v1463 = vxor.u32 %v1462, 2147483648
    %v1464 = vmul.f32 %v1463, 1.442695
    %v1465 = vpow.pop %v1464
    %v1466 = vadd.f32 %v1465, 1.0
    %v1467 = vrcp.pop %v1466
    %v1468 = vmul.f32 1.0, %v1467
    %v1469 = vtanh.pop %v1462
    %v1471 = vrot.slane %v1266, 2
    %v1473 = vmul.f32 %v1468, %v1471
    %1475 = vrot.lane.b32.xlu0 %v1469, 80
    %v1476 = vpop.permute.xlu0 %1475
    %v1478 = vmul.f32 %v1468, %v1476
    %1480 = vrot.lane.b32.xlu0 %v1478, 16
    %v1481 = vpop.permute.xlu0 %1480
    %v1483 = vadd.f32 %v1473, %v1481
    %v1484 = vtanh.pop %v1483
    %1486 = vrot.lane.b32.xlu0 %v1484, 16
    %v1487 = vpop.permute.xlu0 %1486
    %v1489 = vmul.f32 %v1468, %v1487
    %v1491 = vrot.slane %v1379, 2
    %1492 = vrot.lane.b32.xlu0 %v1491, 96
    %v1493 = vpop.permute.xlu0 %1492
    %v1494 = vsel %vm192, %v1493, 0
    %1496 = vmatprep.subr.mxu0 0.0
    %1497 = vmatpush1.msra.mxu0 0.0
    %1498 = vmatprep.subr.mxu0 0.0
    %1499 = vmatpush1.msra.mxu0 0.0
    %1500 = vmatprep.subr.mxu0 0.0
    %1501 = vmatpush1.msra.mxu0 0.0
    %1502 = vmatprep.subr.mxu0 0.0
    %1503 = vmatpush1.msra.mxu0 0.0
    %1504 = vmatprep.subr.mxu0 0.0
    %1505 = vmatpush1.msra.mxu0 0.0
    %1506 = vmatprep.subr.mxu0 0.0
    %1507 = vmatpush1.msra.mxu0 0.0
    %1508 = vmatprep.subr.mxu0 0.0
    %1509 = vmatpush1.msra.mxu0 0.0
    %1510 = vmatprep.subr.mxu0 0.0
    %1511 = vmatpush1.msra.mxu0 0.0
    %1512 = vmatprep.subr.mxu0 0.0
    %1513 = vmatpush1.msra.mxu0 0.0
    %1514 = vmatprep.subr.mxu0 0.0
    %1515 = vmatpush1.msra.mxu0 0.0
    %1516 = vmatprep.subr.mxu0 0.0
    %1517 = vmatpush1.msra.mxu0 0.0
    %1518 = vmatprep.subr.mxu0 0.0
    %1519 = vmatpush1.msra.mxu0 0.0
    %1520 = vmatprep.subr.mxu0 0.0
    %1521 = vmatpush1.msra.mxu0 0.0
    %1522 = vmatprep.subr.mxu0 0.0
    %1523 = vmatpush1.msra.mxu0 0.0
    %1524 = vmatprep.subr.mxu0 0.0
    %1525 = vmatpush1.msra.mxu0 %v99
    %1526 = vmatprep.subr.mxu0 0.0
    %1527 = vmatpush1.msra.mxu0 %v98
    %1528 = vmatprep.subr.mxu0 0.0
    %1529 = vmatpush2.msra.mxu0 0.0
    %1530 = vmatprep.subr.mxu0 0.0
    %1531 = vmatpush2.msra.mxu0 0.0
    %1532 = vmatprep.subr.mxu0 0.0
    %1533 = vmatpush2.msra.mxu0 0.0
    %1534 = vmatprep.subr.mxu0 0.0
    %1535 = vmatpush2.msra.mxu0 0.0
    %1536 = vmatprep.subr.mxu0 0.0
    %1537 = vmatpush2.msra.mxu0 0.0
    %1538 = vmatprep.subr.mxu0 0.0
    %1539 = vmatpush2.msra.mxu0 0.0
    %1540 = vmatprep.subr.mxu0 0.0
    %1541 = vmatpush2.msra.mxu0 0.0
    %1542 = vmatprep.subr.mxu0 0.0
    %1543 = vmatpush2.msra.mxu0 0.0
    %1544 = vmatprep.subr.mxu0 0.0
    %1545 = vmatpush2.msra.mxu0 0.0
    %1546 = vmatprep.subr.mxu0 0.0
    %1547 = vmatpush2.msra.mxu0 0.0
    %1548 = vmatprep.subr.mxu0 0.0
    %1549 = vmatpush2.msra.mxu0 0.0
    %1550 = vmatprep.subr.mxu0 0.0
    %1551 = vmatpush2.msra.mxu0 0.0
    %1552 = vmatprep.subr.mxu0 0.0
    %1553 = vmatpush2.msra.mxu0 0.0
    %1554 = vmatprep.subr.mxu0 0.0
    %1555 = vmatpush2.msra.mxu0 0.0
    %1556 = vmatprep.subr.mxu0 0.0
    %1557 = vmatpush2.msra.mxu0 0.0
    %1558 = vmatprep.subr.mxu0 0.0
    %1559 = vmatpush2.msra.mxu0 0.0
    %1560 = vmatprep.mubr.f32.mxu0 0.0
    %1561 = vmatmul.mubr.f32.gmra.mxu0 %v1494
    %v1562 = vpop.f32.mrf.mxu0
    %v1563 = vadd.f32 0.0, %v1562
    %v1564 = vpop.f32.mrf.mxu0
    %1565 = vdwg.mxu0
    %v1567 = vrot.slane %v1563, 4
    %v1569 = vadd.f32 %v189, %v1567
    %v1570 = vadd.f32 %v1569, %v271
    %v1571 = vxor.u32 %v1570, 2147483648
    %v1572 = vmul.f32 %v1571, 1.442695
    %v1573 = vpow.pop %v1572
    %v1574 = vadd.f32 %v1573, 1.0
    %v1575 = vrcp.pop %v1574
    %v1576 = vmul.f32 1.0, %v1575
    %v1577 = vtanh.pop %v1570
    %v1579 = vrot.slane %v1373, 6
    %v1581 = vmul.f32 %v1576, %v1579
    %1583 = vrot.lane.b32.xlu0 %v1577, 80
    %v1584 = vpop.permute.xlu0 %1583
    %v1586 = vmul.f32 %v1576, %v1584
    %1588 = vrot.lane.b32.xlu0 %v1586, 16
    %v1589 = vpop.permute.xlu0 %1588
    %v1591 = vadd.f32 %v1581, %v1589
    %v1592 = vtanh.pop %v1591
    %1594 = vrot.lane.b32.xlu0 %v1592, 16
    %v1595 = vpop.permute.xlu0 %1594
    %v1597 = vmul.f32 %v1576, %v1595
    %v1599 = vrot.slane %v1489, 4
    %1600 = vrot.lane.b32.xlu0 %v1599, 32
    %v1601 = vpop.permute.xlu0 %1600
    %v1602 = vsel %vm192, %v1601, 0
    %1604 = vmatprep.subr.mxu0 0.0
    %1605 = vmatpush1.msra.mxu0 0.0
    %1606 = vmatprep.subr.mxu0 0.0
    %1607 = vmatpush1.msra.mxu0 0.0
    %1608 = vmatprep.subr.mxu0 0.0
    %1609 = vmatpush1.msra.mxu0 0.0
    %1610 = vmatprep.subr.mxu0 0.0
    %1611 = vmatpush1.msra.mxu0 0.0
    %1612 = vmatprep.subr.mxu0 0.0
    %1613 = vmatpush1.msra.mxu0 0.0
    %1614 = vmatprep.subr.mxu0 0.0
    %1615 = vmatpush1.msra.mxu0 0.0
    %1616 = vmatprep.subr.mxu0 0.0
    %1617 = vmatpush1.msra.mxu0 0.0
    %1618 = vmatprep.subr.mxu0 0.0
    %1619 = vmatpush1.msra.mxu0 0.0
    %1620 = vmatprep.subr.mxu0 0.0
    %1621 = vmatpush1.msra.mxu0 0.0
    %1622 = vmatprep.subr.mxu0 0.0
    %1623 = vmatpush1.msra.mxu0 0.0
    %1624 = vmatprep.subr.mxu0 0.0
    %1625 = vmatpush1.msra.mxu0 0.0
    %1626 = vmatprep.subr.mxu0 0.0
    %1627 = vmatpush1.msra.mxu0 0.0
    %1628 = vmatprep.subr.mxu0 0.0
    %1629 = vmatpush1.msra.mxu0 0.0
    %1630 = vmatprep.subr.mxu0 0.0
    %1631 = vmatpush1.msra.mxu0 0.0
    %1632 = vmatprep.subr.mxu0 0.0
    %1633 = vmatpush1.msra.mxu0 %v101
    %1634 = vmatprep.subr.mxu0 0.0
    %1635 = vmatpush1.msra.mxu0 %v100
    %1636 = vmatprep.subr.mxu0 0.0
    %1637 = vmatpush2.msra.mxu0 0.0
    %1638 = vmatprep.subr.mxu0 0.0
    %1639 = vmatpush2.msra.mxu0 0.0
    %1640 = vmatprep.subr.mxu0 0.0
    %1641 = vmatpush2.msra.mxu0 0.0
    %1642 = vmatprep.subr.mxu0 0.0
    %1643 = vmatpush2.msra.mxu0 0.0
    %1644 = vmatprep.subr.mxu0 0.0
    %1645 = vmatpush2.msra.mxu0 0.0
    %1646 = vmatprep.subr.mxu0 0.0
    %1647 = vmatpush2.msra.mxu0 0.0
    %1648 = vmatprep.subr.mxu0 0.0
    %1649 = vmatpush2.msra.mxu0 0.0
    %1650 = vmatprep.subr.mxu0 0.0
    %1651 = vmatpush2.msra.mxu0 0.0
    %1652 = vmatprep.subr.mxu0 0.0
    %1653 = vmatpush2.msra.mxu0 0.0
    %1654 = vmatprep.subr.mxu0 0.0
    %1655 = vmatpush2.msra.mxu0 0.0
    %1656 = vmatprep.subr.mxu0 0.0
    %1657 = vmatpush2.msra.mxu0 0.0
    %1658 = vmatprep.subr.mxu0 0.0
    %1659 = vmatpush2.msra.mxu0 0.0
    %1660 = vmatprep.subr.mxu0 0.0
    %1661 = vmatpush2.msra.mxu0 0.0
    %1662 = vmatprep.subr.mxu0 0.0
    %1663 = vmatpush2.msra.mxu0 0.0
    %1664 = vmatprep.subr.mxu0 0.0
    %1665 = vmatpush2.msra.mxu0 0.0
    %1666 = vmatprep.subr.mxu0 0.0
    %1667 = vmatpush2.msra.mxu0 0.0
    %1668 = vmatprep.mubr.f32.mxu0 0.0
    %1669 = vmatmul.mubr.f32.gmra.mxu0 %v1602
    %v1670 = vpop.f32.mrf.mxu0
    %v1671 = vadd.f32 0.0, %v1670
    %v1672 = vpop.f32.mrf.mxu0
    %1673 = vdwg.mxu0
    %v1675 = vrot.slane %v1671, 6
    %1676 = vrot.lane.b32.xlu0 %v1675, 64
    %v1677 = vpop.permute.xlu0 %1676
    %v1679 = vadd.f32 %v184, %v1677
    %v1680 = vadd.f32 %v1679, %v380
    %v1681 = vxor.u32 %v1680, 2147483648
    %v1682 = vmul.f32 %v1681, 1.442695
    %v1683 = vpow.pop %v1682
    %v1684 = vadd.f32 %v1683, 1.0
    %v1685 = vrcp.pop %v1684
    %v1686 = vmul.f32 1.0, %v1685
    %v1687 = vtanh.pop %v1680
    %v1689 = vrot.slane %v1483, 2
    %v1691 = vmul.f32 %v1686, %v1689
    %1693 = vrot.lane.b32.xlu0 %v1687, 80
    %v1694 = vpop.permute.xlu0 %1693
    %v1696 = vmul.f32 %v1686, %v1694
    %1698 = vrot.lane.b32.xlu0 %v1696, 16
    %v1699 = vpop.permute.xlu0 %1698
    %v1701 = vadd.f32 %v1691, %v1699
    %v1702 = vtanh.pop %v1701
    %1704 = vrot.lane.b32.xlu0 %v1702, 16
    %v1705 = vpop.permute.xlu0 %1704
    %v1707 = vmul.f32 %v1686, %v1705
    %v1709 = vrot.slane %v1597, 4
    %1710 = vrot.lane.b32.xlu0 %v1709, 96
    %v1711 = vpop.permute.xlu0 %1710
    %v1712 = vsel %vm192, %v1711, 0
    %1714 = vmatprep.subr.mxu0 0.0
    %1715 = vmatpush1.msra.mxu0 0.0
    %1716 = vmatprep.subr.mxu0 0.0
    %1717 = vmatpush1.msra.mxu0 0.0
    %1718 = vmatprep.subr.mxu0 0.0
    %1719 = vmatpush1.msra.mxu0 0.0
    %1720 = vmatprep.subr.mxu0 0.0
    %1721 = vmatpush1.msra.mxu0 0.0
    %1722 = vmatprep.subr.mxu0 0.0
    %1723 = vmatpush1.msra.mxu0 0.0
    %1724 = vmatprep.subr.mxu0 0.0
    %1725 = vmatpush1.msra.mxu0 0.0
    %1726 = vmatprep.subr.mxu0 0.0
    %1727 = vmatpush1.msra.mxu0 0.0
    %1728 = vmatprep.subr.mxu0 0.0
    %1729 = vmatpush1.msra.mxu0 0.0
    %1730 = vmatprep.subr.mxu0 0.0
    %1731 = vmatpush1.msra.mxu0 0.0
    %1732 = vmatprep.subr.mxu0 0.0
    %1733 = vmatpush1.msra.mxu0 0.0
    %1734 = vmatprep.subr.mxu0 0.0
    %1735 = vmatpush1.msra.mxu0 0.0
    %1736 = vmatprep.subr.mxu0 0.0
    %1737 = vmatpush1.msra.mxu0 0.0
    %1738 = vmatprep.subr.mxu0 0.0
    %1739 = vmatpush1.msra.mxu0 0.0
    %1740 = vmatprep.subr.mxu0 0.0
    %1741 = vmatpush1.msra.mxu0 0.0
    %1742 = vmatprep.subr.mxu0 0.0
    %1743 = vmatpush1.msra.mxu0 %v99
    %1744 = vmatprep.subr.mxu0 0.0
    %1745 = vmatpush1.msra.mxu0 %v98
    %1746 = vmatprep.subr.mxu0 0.0
    %1747 = vmatpush2.msra.mxu0 0.0
    %1748 = vmatprep.subr.mxu0 0.0
    %1749 = vmatpush2.msra.mxu0 0.0
    %1750 = vmatprep.subr.mxu0 0.0
    %1751 = vmatpush2.msra.mxu0 0.0
    %1752 = vmatprep.subr.mxu0 0.0
    %1753 = vmatpush2.msra.mxu0 0.0
    %1754 = vmatprep.subr.mxu0 0.0
    %1755 = vmatpush2.msra.mxu0 0.0
    %1756 = vmatprep.subr.mxu0 0.0
    %1757 = vmatpush2.msra.mxu0 0.0
    %1758 = vmatprep.subr.mxu0 0.0
    %1759 = vmatpush2.msra.mxu0 0.0
    %1760 = vmatprep.subr.mxu0 0.0
    %1761 = vmatpush2.msra.mxu0 0.0
    %1762 = vmatprep.subr.mxu0 0.0
    %1763 = vmatpush2.msra.mxu0 0.0
    %1764 = vmatprep.subr.mxu0 0.0
    %1765 = vmatpush2.msra.mxu0 0.0
    %1766 = vmatprep.subr.mxu0 0.0
    %1767 = vmatpush2.msra.mxu0 0.0
    %1768 = vmatprep.subr.mxu0 0.0
    %1769 = vmatpush2.msra.mxu0 0.0
    %1770 = vmatprep.subr.mxu0 0.0
    %1771 = vmatpush2.msra.mxu0 0.0
    %1772 = vmatprep.subr.mxu0 0.0
    %1773 = vmatpush2.msra.mxu0 0.0
    %1774 = vmatprep.subr.mxu0 0.0
    %1775 = vmatpush2.msra.mxu0 0.0
    %1776 = vmatprep.subr.mxu0 0.0
    %1777 = vmatpush2.msra.mxu0 0.0
    %1778 = vmatprep.mubr.f32.mxu0 0.0
    %1779 = vmatmul.mubr.f32.gmra.mxu0 %v1712
    %v1780 = vpop.f32.mrf.mxu0
    %v1781 = vadd.f32 0.0, %v1780
    %v1782 = vpop.f32.mrf.mxu0
    %1783 = vdwg.mxu0
    %v1785 = vrot.slane %v1781, 2
    %v1787 = vadd.f32 %v189, %v1785
    %v1788 = vadd.f32 %v1787, %v271
    %v1789 = vxor.u32 %v1788, 2147483648
    %v1790 = vmul.f32 %v1789, 1.442695
    %v1791 = vpow.pop %v1790
    %v1792 = vadd.f32 %v1791, 1.0
    %v1793 = vrcp.pop %v1792
    %v1794 = vmul.f32 1.0, %v1793
    %v1795 = vtanh.pop %v1788
    %v1797 = vrot.slane %v1591, 6
    %v1799 = vmul.f32 %v1794, %v1797
    %1801 = vrot.lane.b32.xlu0 %v1795, 80
    %v1802 = vpop.permute.xlu0 %1801
    %v1804 = vmul.f32 %v1794, %v1802
    %1806 = vrot.lane.b32.xlu0 %v1804, 16
    %v1807 = vpop.permute.xlu0 %1806
    %v1809 = vadd.f32 %v1799, %v1807
    %v1810 = vtanh.pop %v1809
    %1812 = vrot.lane.b32.xlu0 %v1810, 16
    %v1813 = vpop.permute.xlu0 %1812
    %v1815 = vmul.f32 %v1794, %v1813
    %v1817 = vrot.slane %v1707, 2
    %1818 = vrot.lane.b32.xlu0 %v1817, 32
    %v1819 = vpop.permute.xlu0 %1818
    %v1820 = vsel %vm192, %v1819, 0
    %1822 = vmatprep.subr.mxu0 0.0
    %1823 = vmatpush1.msra.mxu0 0.0
    %1824 = vmatprep.subr.mxu0 0.0
    %1825 = vmatpush1.msra.mxu0 0.0
    %1826 = vmatprep.subr.mxu0 0.0
    %1827 = vmatpush1.msra.mxu0 0.0
    %1828 = vmatprep.subr.mxu0 0.0
    %1829 = vmatpush1.msra.mxu0 0.0
    %1830 = vmatprep.subr.mxu0 0.0
    %1831 = vmatpush1.msra.mxu0 0.0
    %1832 = vmatprep.subr.mxu0 0.0
    %1833 = vmatpush1.msra.mxu0 0.0
    %1834 = vmatprep.subr.mxu0 0.0
    %1835 = vmatpush1.msra.mxu0 0.0
    %1836 = vmatprep.subr.mxu0 0.0
    %1837 = vmatpush1.msra.mxu0 0.0
    %1838 = vmatprep.subr.mxu0 0.0
    %1839 = vmatpush1.msra.mxu0 0.0
    %1840 = vmatprep.subr.mxu0 0.0
    %1841 = vmatpush1.msra.mxu0 0.0
    %1842 = vmatprep.subr.mxu0 0.0
    %1843 = vmatpush1.msra.mxu0 0.0
    %1844 = vmatprep.subr.mxu0 0.0
    %1845 = vmatpush1.msra.mxu0 0.0
    %1846 = vmatprep.subr.mxu0 0.0
    %1847 = vmatpush1.msra.mxu0 0.0
    %1848 = vmatprep.subr.mxu0 0.0
    %1849 = vmatpush1.msra.mxu0 0.0
    %1850 = vmatprep.subr.mxu0 0.0
    %1851 = vmatpush1.msra.mxu0 %v101
    %1852 = vmatprep.subr.mxu0 0.0
    %1853 = vmatpush1.msra.mxu0 %v100
    %1854 = vmatprep.subr.mxu0 0.0
    %1855 = vmatpush2.msra.mxu0 0.0
    %1856 = vmatprep.subr.mxu0 0.0
    %1857 = vmatpush2.msra.mxu0 0.0
    %1858 = vmatprep.subr.mxu0 0.0
    %1859 = vmatpush2.msra.mxu0 0.0
    %1860 = vmatprep.subr.mxu0 0.0
    %1861 = vmatpush2.msra.mxu0 0.0
    %1862 = vmatprep.subr.mxu0 0.0
    %1863 = vmatpush2.msra.mxu0 0.0
    %1864 = vmatprep.subr.mxu0 0.0
    %1865 = vmatpush2.msra.mxu0 0.0
    %1866 = vmatprep.subr.mxu0 0.0
    %1867 = vmatpush2.msra.mxu0 0.0
    %1868 = vmatprep.subr.mxu0 0.0
    %1869 = vmatpush2.msra.mxu0 0.0
    %1870 = vmatprep.subr.mxu0 0.0
    %1871 = vmatpush2.msra.mxu0 0.0
    %1872 = vmatprep.subr.mxu0 0.0
    %1873 = vmatpush2.msra.mxu0 0.0
    %1874 = vmatprep.subr.mxu0 0.0
    %1875 = vmatpush2.msra.mxu0 0.0
    %1876 = vmatprep.subr.mxu0 0.0
    %1877 = vmatpush2.msra.mxu0 0.0
    %1878 = vmatprep.subr.mxu0 0.0
    %1879 = vmatpush2.msra.mxu0 0.0
    %1880 = vmatprep.subr.mxu0 0.0
    %1881 = vmatpush2.msra.mxu0 0.0
    %1882 = vmatprep.subr.mxu0 0.0
    %1883 = vmatpush2.msra.mxu0 0.0
    %1884 = vmatprep.subr.mxu0 0.0
    %1885 = vmatpush2.msra.mxu0 0.0
    %1886 = vmatprep.mubr.f32.mxu0 0.0
    %1887 = vmatmul.mubr.f32.gmra.mxu0 %v1820
    %v1888 = vpop.f32.mrf.mxu0
    %v1889 = vadd.f32 0.0, %v1888
    %v1890 = vpop.f32.mrf.mxu0
    %1891 = vdwg.mxu0
    %1893 = vrot.lane.b32.xlu0 %v1889, 64
    %v1894 = vpop.permute.xlu0 %1893
    %v1896 = vadd.f32 %v184, %v1894
    %v1897 = vadd.f32 %v1896, %v380
    %v1898 = vxor.u32 %v1897, 2147483648
    %v1899 = vmul.f32 %v1898, 1.442695
    %v1900 = vpow.pop %v1899
    %v1901 = vadd.f32 %v1900, 1.0
    %v1902 = vrcp.pop %v1901
    %v1903 = vmul.f32 1.0, %v1902
    %v1904 = vtanh.pop %v1897
    %v1906 = vrot.slane %v1701, 2
    %v1908 = vmul.f32 %v1903, %v1906
    %1910 = vrot.lane.b32.xlu0 %v1904, 80
    %v1911 = vpop.permute.xlu0 %1910
    %v1913 = vmul.f32 %v1903, %v1911
    %1915 = vrot.lane.b32.xlu0 %v1913, 16
    %v1916 = vpop.permute.xlu0 %1915
    %v1918 = vadd.f32 %v1908, %v1916
    %v1919 = vtanh.pop %v1918
    %1921 = vrot.lane.b32.xlu0 %v1919, 16
    %v1922 = vpop.permute.xlu0 %1921
    %v1924 = vmul.f32 %v1903, %v1922
    %vm1925 = vcmask 1041408
    %v1926 = vsel %vm1925, %v297, %v513
    %vm1927 = vcmask 1043456
    %v1928 = vsel %vm1927, %v1926, %v731
    %vm1929 = vcmask 1045504
    %v1930 = vsel %vm1929, %v1928, %v949
    %v1931 = vsel %vm1925, %v1163, %v1379
    %v1932 = vsel %vm1927, %v1931, %v1597
    %v1933 = vsel %vm1929, %v1932, %v1815
    %v1934 = vsel %vm1925, %v1924, %v1707
    %v1935 = vsel %vm1927, %v1934, %v1489
    %v1936 = vsel %vm1929, %v1935, %v1272
    %v1937 = vsel %vm1925, %v1058, %v841
    %v1938 = vsel %vm1927, %v1937, %v623
    %v1939 = vsel %vm1929, %v1938, %v406
    %1942 = vrot.lane.b32.xlu0 %v1930, 96
    %v1943 = vpop.permute.xlu0 %1942
    %1944 = vrot.lane.b32.xlu0 %v1933, 96
    %v1945 = vpop.permute.xlu0 %1944
    %1950 = vrot.lane.b32.xlu0 %v1936, 48
    %v1951 = vpop.permute.xlu0 %1950
    %1952 = vrot.lane.b32.xlu0 %v1939, 48
    %v1953 = vpop.permute.xlu0 %1952
    %v1956 = vsel %vm192, %v1943, %v1951
    %v1957 = vsel %vm192, %v1945, %v1953
    %v1958 = vld [vmem:[#allocation10] sm:$0xff]
    %v1959 = vld [vmem:[#allocation10 + $0x8] sm:$0xff]
    %v1960 = vld [vmem:[#allocation10 + $0x10] sm:$0xff]
    %v1961 = vld [vmem:[#allocation10 + $0x18] sm:$0xff]
    %v1962 = vld [vmem:[%s7] sm:$0x1]
    %v1964 = vlaneseq
    %v1965 = vshrl.u32 %v1964, 7
    %v1966 = vsub.s32 0, %v1965
    %v1967 = vrot.slane %v1962, %v1966
    %v1970 = vsel %vm110, %v1956, 0
    %v1973 = vsel %vm110, %v1957, 0
    %1975 = vmatprep.subr.mxu0 0.0
    %1976 = vmatpush1.msra.mxu0 0.0
    %1977 = vmatprep.subr.mxu0 0.0
    %1978 = vmatpush1.msra.mxu0 0.0
    %1979 = vmatprep.subr.mxu0 0.0
    %1980 = vmatpush1.msra.mxu0 0.0
    %1981 = vmatprep.subr.mxu0 0.0
    %1982 = vmatpush1.msra.mxu0 0.0
    %1983 = vmatprep.subr.mxu0 0.0
    %1984 = vmatpush1.msra.mxu0 0.0
    %1985 = vmatprep.subr.mxu0 0.0
    %1986 = vmatpush1.msra.mxu0 0.0
    %1987 = vmatprep.subr.mxu0 0.0
    %1988 = vmatpush1.msra.mxu0 0.0
    %1989 = vmatprep.subr.mxu0 0.0
    %1990 = vmatpush1.msra.mxu0 0.0
    %1991 = vmatprep.subr.mxu0 0.0
    %1992 = vmatpush1.msra.mxu0 0.0
    %1993 = vmatprep.subr.mxu0 0.0
    %1994 = vmatpush1.msra.mxu0 0.0
    %1995 = vmatprep.subr.mxu0 0.0
    %1996 = vmatpush1.msra.mxu0 0.0
    %1997 = vmatprep.subr.mxu0 0.0
    %1998 = vmatpush1.msra.mxu0 0.0
    %1999 = vmatprep.subr.mxu0 0.0
    %2000 = vmatpush1.msra.mxu0 %v1961
    %2001 = vmatprep.subr.mxu0 0.0
    %2002 = vmatpush1.msra.mxu0 %v1960
    %2003 = vmatprep.subr.mxu0 0.0
    %2004 = vmatpush1.msra.mxu0 %v1959
    %2005 = vmatprep.subr.mxu0 0.0
    %2006 = vmatpush1.msra.mxu0 %v1958
    %2007 = vmatprep.subr.mxu0 0.0
    %2008 = vmatpush2.msra.mxu0 0.0
    %2009 = vmatprep.subr.mxu0 0.0
    %2010 = vmatpush2.msra.mxu0 0.0
    %2011 = vmatprep.subr.mxu0 0.0
    %2012 = vmatpush2.msra.mxu0 0.0
    %2013 = vmatprep.subr.mxu0 0.0
    %2014 = vmatpush2.msra.mxu0 0.0
    %2015 = vmatprep.subr.mxu0 0.0
    %2016 = vmatpush2.msra.mxu0 0.0
    %2017 = vmatprep.subr.mxu0 0.0
    %2018 = vmatpush2.msra.mxu0 0.0
    %2019 = vmatprep.subr.mxu0 0.0
    %2020 = vmatpush2.msra.mxu0 0.0
    %2021 = vmatprep.subr.mxu0 0.0
    %2022 = vmatpush2.msra.mxu0 0.0
    %2023 = vmatprep.subr.mxu0 0.0
    %2024 = vmatpush2.msra.mxu0 0.0
    %2025 = vmatprep.subr.mxu0 0.0
    %2026 = vmatpush2.msra.mxu0 0.0
    %2027 = vmatprep.subr.mxu0 0.0
    %2028 = vmatpush2.msra.mxu0 0.0
    %2029 = vmatprep.subr.mxu0 0.0
    %2030 = vmatpush2.msra.mxu0 0.0
    %2031 = vmatprep.subr.mxu0 0.0
    %2032 = vmatpush2.msra.mxu0 0.0
    %2033 = vmatprep.subr.mxu0 0.0
    %2034 = vmatpush2.msra.mxu0 0.0
    %2035 = vmatprep.subr.mxu0 0.0
    %2036 = vmatpush2.msra.mxu0 0.0
    %2037 = vmatprep.subr.mxu0 0.0
    %2038 = vmatpush2.msra.mxu0 0.0
    %2039 = vmatprep.mubr.f32.mxu0 0.0
    %2040 = vmatmul.mubr.f32.gmra.mxu0 %v1970
    %v2041 = vpop.f32.mrf.mxu0
    %v2042 = vadd.f32 %v1967, %v2041
    %v2043 = vpop.f32.mrf.mxu0
    %2044 = vmatprep.mubr.f32.mxu0 0.0
    %2045 = vmatmul.mubr.f32.gmra.mxu0 %v1973
    %v2046 = vpop.f32.mrf.mxu0
    %v2047 = vadd.f32 %v1967, %v2046
    %v2048 = vpop.f32.mrf.mxu0
    %2049 = vdwg.mxu0
    %2050 = vst [vmem:[#allocation11] sm:$0xff] %v2042
    %2051 = vst [vmem:[#allocation11 + $0x8] sm:$0xff] %v2047
    // Predicated region
    $region54: #{tpu_custom_call.1} parent=1 // pred_check
      _
    $region55: #{tpu_custom_call.1} parent=1 // pred_check_branch
      %2053 = sbr.rel (0) target = $region57
    $region56: #{tpu_custom_call.1} parent=1 // pred_region
      %s2055 = ssub.s32 256, 256
      %2056 = vsyncadd [#allocation4], %s2055
      %s2057 = sshll.u32 [#allocation11], 4
      %s2058 = int_to_ptr.vmem [resolvable:$true] %s2057
      %2063 = dma.vmem_to_hbm [thread:$0]  %s2058, 256, %s8, [#allocation4], 128, 128, 8
    $region57: #{tpu_custom_call.1} parent=1 // pred_fallthru
      _
    // Predicated region
    $region58: #{tpu_custom_call.1} parent=1 // pred_check
      _
    $region59: #{tpu_custom_call.1} parent=1 // pred_check_branch
      %2065 = sbr.rel (0) target = $region61
    $region60: #{tpu_custom_call.1} parent=1 // pred_region
      %2066 = dma.done [#allocation4], 256
    $region61: #{tpu_custom_call.1} parent=1 // pred_fallthru
      _
    %2067 = vsyncpa [#allocation3], 1
    %2068 = vsyncpa [#allocation6], 1
    %2069 = vsyncpa [#allocation9], 1
    %2070 = vsyncpa [#allocation4], 1

</llo_original>
